<compile_context>
chip_gen: v7x
topology: tpu7x:2x2x1
jax: 0.10.0
libtpu: 0.0.40
codegen_flags: <defaults>
</compile_context>

<pallas_src>
import functools
import math

import jax
import jax.numpy as jnp
from jax.experimental import pallas as pl
from jax.experimental.pallas import tpu as pltpu

IN_FEATS = 50    # text_features
HIDDEN = 32      # RNN(50, 32, 20) hidden_size
OUT_FEATS = 20   # RNN(50, 32, 20) output_size


# ----------------------------------------------------------------------------
# Fused RNN recurrence + LogSoftmax kernel (single invocation, all in VMEM).
# ----------------------------------------------------------------------------
def _rnn_kernel(x_ref, wxh_ref, whh_ref, bh_ref, wxo_ref, who_ref, bo_ref,
                out_ref, hid_ref, *, seq_len, batch):
    """x_ref: (T*N, F) time-major (rows [t*N:(t+1)*N] = timestep t).
    wxh/whh: (F,H)/(H,H); wxo/who: (F,O)/(H,O); bh/bo: (1,H)/(1,O).
    out_ref: (T*N, O) log-softmax outputs; hid_ref: (N, H) final hidden."""
    x = x_ref[...]
    # Batched input projections for every timestep (one MXU matmul each).
    xu_h = jnp.dot(x, wxh_ref[...], preferred_element_type=jnp.float32) + bh_ref[...]
    xu_o = jnp.dot(x, wxo_ref[...], preferred_element_type=jnp.float32) + bo_ref[...]

    whh = whh_ref[...]
    who = who_ref[...]

    h = jnp.zeros((batch, whh.shape[1]), jnp.float32)
    for t in range(seq_len):                      # static unroll (small T)
        lo = t * batch
        # output uses the *previous* hidden: combined = [x_t, h_t]
        o_t = xu_o[lo:lo + batch, :] + jnp.dot(
            h, who, preferred_element_type=jnp.float32)
        # LogSoftmax(dim=1)  -> class dimension (last dim here)
        z = o_t - jnp.max(o_t, axis=-1, keepdims=True)
        lse = jnp.log(jnp.sum(jnp.exp(z), axis=-1, keepdims=True))
        out_ref[lo:lo + batch, :] = (z - lse).astype(out_ref.dtype)
        # hidden update (no nonlinearity in the reference cell)
        h = xu_h[lo:lo + batch, :] + jnp.dot(
            h, whh, preferred_element_type=jnp.float32)

    hid_ref[...] = h.astype(hid_ref.dtype)


def desc_encoder_forward(params, x):
    """x: (N, T, IN_FEATS) -> (out: (T, N, OUT_FEATS), hidden: (N, HIDDEN))."""
    n, t, f = x.shape
    assert f == IN_FEATS
    # torch: x = x.permute(1, 0, 2); flatten (T, N) for a lane-friendly 2-D layout.
    x2d = jnp.transpose(x.astype(jnp.float32), (1, 0, 2)).reshape(t * n, f)

    wxh, whh, bh = params["wxh"], params["whh"], params["bh"]
    wxo, who, bo = params["wxo"], params["who"], params["bo"]
    hdim = whh.shape[0]
    odim = who.shape[1]

    def full2d(shape):
        return pl.BlockSpec(shape, lambda i: (0, 0))   # whole array, VMEM-resident

    out2d, hidden = pl.pallas_call(
        functools.partial(_rnn_kernel, seq_len=t, batch=n),
        out_shape=(jax.ShapeDtypeStruct((t * n, odim), jnp.float32),
                   jax.ShapeDtypeStruct((n, hdim), jnp.float32)),
        grid=(1,),
        in_specs=[
            full2d((t * n, f)),
            full2d((f, hdim)), full2d((hdim, hdim)), full2d((1, hdim)),
            full2d((f, odim)), full2d((hdim, odim)), full2d((1, odim)),
        ],
        out_specs=(full2d((t * n, odim)), full2d((n, hdim))),
        compiler_params=pltpu.CompilerParams(
            dimension_semantics=("arbitrary",)),
    )(x2d, wxh, whh, bh.reshape(1, hdim), wxo, who, bo.reshape(1, odim))

    return out2d.reshape(t, n, odim), hidden


# ----------------------------------------------------------------------------
# Deterministic parameter init (PyTorch nn.Linear default: U(+-1/sqrt(fan_in))).
# ----------------------------------------------------------------------------
def init_params(key):
    cat = IN_FEATS + HIDDEN   # 82 = input_size + hidden_size
    k = jax.random.split(key, 4)
    bound = 1.0 / math.sqrt(cat)
    w_i2h = jax.random.uniform(k[0], (cat, HIDDEN), jnp.float32, -bound, bound)    # W^T
    b_i2h = jax.random.uniform(k[1], (HIDDEN,), jnp.float32, -bound, bound)
    w_i2o = jax.random.uniform(k[2], (cat, OUT_FEATS), jnp.float32, -bound, bound)  # W^T
    b_i2o = jax.random.uniform(k[3], (OUT_FEATS,), jnp.float32, -bound, bound)
    return {
        # split along the concat dim so the kernel never concatenates [x_t, h_t]
        "wxh": w_i2h[:IN_FEATS], "whh": w_i2h[IN_FEATS:], "bh": b_i2h,
        "wxo": w_i2o[:IN_FEATS], "who": w_i2o[IN_FEATS:], "bo": b_i2o,
    }


# ----------------------------------------------------------------------------
# Pure-JAX reference (mirrors the RNN cell applied recurrently over time).
# ----------------------------------------------------------------------------
def reference_forward(params, x):
    n, t, _ = x.shape
    xt = jnp.transpose(x.astype(jnp.float32), (1, 0, 2))
    w_i2h = jnp.concatenate([params["wxh"], params["whh"]], axis=0)
    w_i2o = jnp.concatenate([params["wxo"], params["who"]], axis=0)
    h = jnp.zeros((n, params["whh"].shape[0]), jnp.float32)
    outs = []
    for s in range(t):
        comb = jnp.concatenate([xt[s], h], axis=1)
        o = comb @ w_i2o + params["bo"]
        outs.append(jax.nn.log_softmax(o, axis=1))
        h = comb @ w_i2h + params["bh"]
    return jnp.stack(outs, axis=0), h


if __name__ == "__main__":
    BATCH, TIME = 2, 8

    key = jax.random.PRNGKey(0)
    kp, kx = jax.random.split(key)
    params = init_params(kp)
    x = jax.random.normal(kx, (BATCH, TIME, IN_FEATS), jnp.float32)

    out, hidden = desc_encoder_forward(params, x)
    out = jax.block_until_ready(out)
    hidden = jax.block_until_ready(hidden)

    assert out.shape == (TIME, BATCH, OUT_FEATS), out.shape
    assert hidden.shape == (BATCH, HIDDEN), hidden.shape
    assert bool(jnp.all(jnp.isfinite(out)))
    assert bool(jnp.all(jnp.isfinite(hidden)))
    # log-softmax rows must exponentiate-sum to 1
    assert bool(jnp.all(jnp.abs(jnp.sum(jnp.exp(out), axis=-1) - 1.0) < 1e-4))

    # tolerance check against the pure-JAX reference
    ref_out, ref_hidden = reference_forward(params, x)
    assert bool(jnp.allclose(out, ref_out, atol=1e-4, rtol=1e-4))
    assert bool(jnp.allclose(hidden, ref_hidden, atol=1e-4, rtol=1e-4))

    print("KERNEL_OK")
</pallas_src>

<mosaic_0001>
module attributes {stable_mosaic.version = 11 : i64} {
  func.func @_rnn_kernel(%arg0: i32, %arg1: memref<16x50xf32, #tpu.memory_space<vmem>>, %arg2: memref<50x32xf32, #tpu.memory_space<vmem>>, %arg3: memref<32x32xf32, #tpu.memory_space<vmem>>, %arg4: memref<1x32xf32, #tpu.memory_space<vmem>>, %arg5: memref<50x20xf32, #tpu.memory_space<vmem>>, %arg6: memref<32x20xf32, #tpu.memory_space<vmem>>, %arg7: memref<1x20xf32, #tpu.memory_space<vmem>>, %arg8: memref<16x20xf32, #tpu.memory_space<vmem>>, %arg9: memref<2x32xf32, #tpu.memory_space<vmem>>) attributes {dimension_semantics = [#tpu.dimension_semantics<arbitrary>], iteration_bounds = array<i64: 1>, scalar_prefetch = 0 : i64, scratch_operands = 0 : i64, tpu.core_type = #tpu.core_type<tc>, window_params = [{pipeline_mode = #tpu.pipeline_mode<synchronous>, transform_indices = @transform_0, window_bounds = array<i64: 16, 50>}, {pipeline_mode = #tpu.pipeline_mode<synchronous>, transform_indices = @transform_1, window_bounds = array<i64: 50, 32>}, {pipeline_mode = #tpu.pipeline_mode<synchronous>, transform_indices = @transform_2, window_bounds = array<i64: 32, 32>}, {pipeline_mode = #tpu.pipeline_mode<synchronous>, transform_indices = @transform_3, window_bounds = array<i64: 1, 32>}, {pipeline_mode = #tpu.pipeline_mode<synchronous>, transform_indices = @transform_4, window_bounds = array<i64: 50, 20>}, {pipeline_mode = #tpu.pipeline_mode<synchronous>, transform_indices = @transform_5, window_bounds = array<i64: 32, 20>}, {pipeline_mode = #tpu.pipeline_mode<synchronous>, transform_indices = @transform_6, window_bounds = array<i64: 1, 20>}, {pipeline_mode = #tpu.pipeline_mode<synchronous>, transform_indices = @transform_7, window_bounds = array<i64: 16, 20>}, {pipeline_mode = #tpu.pipeline_mode<synchronous>, transform_indices = @transform_8, window_bounds = array<i64: 2, 32>}]} {
    %c0 = arith.constant 0 : index
    %c0_0 = arith.constant 0 : index
    %0 = vector.load %arg1[%c0, %c0_0] : memref<16x50xf32, #tpu.memory_space<vmem>>, vector<16x50xf32>
    %c0_1 = arith.constant 0 : index
    %c0_2 = arith.constant 0 : index
    %1 = vector.load %arg2[%c0_1, %c0_2] : memref<50x32xf32, #tpu.memory_space<vmem>>, vector<50x32xf32>
    %cst = arith.constant dense<0.000000e+00> : vector<16x32xf32>
    %2 = tpu.matmul %0, %1, %cst {dimension_numbers = #tpu.dot_dimension_numbers<[1], [0], [0], [1], [0, 0, 1, 1], [], []>} : vector<16x50xf32>, vector<50x32xf32>, vector<16x32xf32> -> vector<16x32xf32>
    %c0_3 = arith.constant 0 : index
    %c0_4 = arith.constant 0 : index
    %3 = vector.load %arg4[%c0_3, %c0_4] : memref<1x32xf32, #tpu.memory_space<vmem>>, vector<1x32xf32>
    %4 = vector.broadcast %3 : vector<1x32xf32> to vector<16x32xf32>
    %5 = arith.addf %2, %4 : vector<16x32xf32>
    %c0_5 = arith.constant 0 : index
    %c0_6 = arith.constant 0 : index
    %6 = vector.load %arg5[%c0_5, %c0_6] : memref<50x20xf32, #tpu.memory_space<vmem>>, vector<50x20xf32>
    %cst_7 = arith.constant dense<0.000000e+00> : vector<16x20xf32>
    %7 = tpu.matmul %0, %6, %cst_7 {dimension_numbers = #tpu.dot_dimension_numbers<[1], [0], [0], [1], [0, 0, 1, 1], [], []>} : vector<16x50xf32>, vector<50x20xf32>, vector<16x20xf32> -> vector<16x20xf32>
    %c0_8 = arith.constant 0 : index
    %c0_9 = arith.constant 0 : index
    %8 = vector.load %arg7[%c0_8, %c0_9] : memref<1x20xf32, #tpu.memory_space<vmem>>, vector<1x20xf32>
    %9 = vector.broadcast %8 : vector<1x20xf32> to vector<16x20xf32>
    %10 = arith.addf %7, %9 : vector<16x20xf32>
    %c0_10 = arith.constant 0 : index
    %c0_11 = arith.constant 0 : index
    %11 = vector.load %arg3[%c0_10, %c0_11] : memref<32x32xf32, #tpu.memory_space<vmem>>, vector<32x32xf32>
    %c0_12 = arith.constant 0 : index
    %c0_13 = arith.constant 0 : index
    %12 = vector.load %arg6[%c0_12, %c0_13] : memref<32x20xf32, #tpu.memory_space<vmem>>, vector<32x20xf32>
    %cst_14 = arith.constant 0.000000e+00 : f32
    %13 = vector.broadcast %cst_14 : f32 to vector<2x32xf32>
    %14 = vector.extract_strided_slice %10 {offsets = [0, 0], sizes = [2, 20], strides = [1, 1]} : vector<16x20xf32> to vector<2x20xf32>
    %cst_15 = arith.constant dense<0.000000e+00> : vector<2x20xf32>
    %15 = tpu.matmul %13, %12, %cst_15 {dimension_numbers = #tpu.dot_dimension_numbers<[1], [0], [0], [1], [0, 0, 1, 1], [], []>} : vector<2x32xf32>, vector<32x20xf32>, vector<2x20xf32> -> vector<2x20xf32>
    %16 = arith.addf %14, %15 : vector<2x20xf32>
    %cst_16 = arith.constant dense<0xFF800000> : vector<2xf32>
    %17 = vector.multi_reduction <maximumf>, %16, %cst_16 [1] : vector<2x20xf32> to vector<2xf32>
    %18 = vector.shape_cast %17 : vector<2xf32> to vector<2x1xf32>
    %19 = vector.broadcast %18 : vector<2x1xf32> to vector<2x20xf32>
    %20 = arith.subf %16, %19 : vector<2x20xf32>
    %21 = math.exp %20 : vector<2x20xf32>
    %cst_17 = arith.constant dense<0.000000e+00> : vector<2xf32>
    %22 = vector.multi_reduction <add>, %21, %cst_17 [1] : vector<2x20xf32> to vector<2xf32>
    %23 = vector.shape_cast %22 : vector<2xf32> to vector<2x1xf32>
    %24 = math.log %23 : vector<2x1xf32>
    %25 = vector.broadcast %24 : vector<2x1xf32> to vector<2x20xf32>
    %26 = arith.subf %20, %25 : vector<2x20xf32>
    %c0_18 = arith.constant 0 : index
    %c0_19 = arith.constant 0 : index
    %27 = vector.load %arg8[%c0_18, %c0_19] : memref<16x20xf32, #tpu.memory_space<vmem>>, vector<2x20xf32>
    tpu.vector_store %arg8[%c0_18, %c0_19], %26 {strides = array<i32>} : memref<16x20xf32, #tpu.memory_space<vmem>>, vector<2x20xf32>,
    %28 = vector.extract_strided_slice %5 {offsets = [0, 0], sizes = [2, 32], strides = [1, 1]} : vector<16x32xf32> to vector<2x32xf32>
    %cst_20 = arith.constant dense<0.000000e+00> : vector<2x32xf32>
    %29 = tpu.matmul %13, %11, %cst_20 {dimension_numbers = #tpu.dot_dimension_numbers<[1], [0], [0], [1], [0, 0, 1, 1], [], []>} : vector<2x32xf32>, vector<32x32xf32>, vector<2x32xf32> -> vector<2x32xf32>
    %30 = arith.addf %28, %29 : vector<2x32xf32>
    %31 = vector.extract_strided_slice %10 {offsets = [2, 0], sizes = [2, 20], strides = [1, 1]} : vector<16x20xf32> to vector<2x20xf32>
    %cst_21 = arith.constant dense<0.000000e+00> : vector<2x20xf32>
    %32 = tpu.matmul %30, %12, %cst_21 {dimension_numbers = #tpu.dot_dimension_numbers<[1], [0], [0], [1], [0, 0, 1, 1], [], []>} : vector<2x32xf32>, vector<32x20xf32>, vector<2x20xf32> -> vector<2x20xf32>
    %33 = arith.addf %31, %32 : vector<2x20xf32>
    %cst_22 = arith.constant dense<0xFF800000> : vector<2xf32>
    %34 = vector.multi_reduction <maximumf>, %33, %cst_22 [1] : vector<2x20xf32> to vector<2xf32>
    %35 = vector.shape_cast %34 : vector<2xf32> to vector<2x1xf32>
    %36 = vector.broadcast %35 : vector<2x1xf32> to vector<2x20xf32>
    %37 = arith.subf %33, %36 : vector<2x20xf32>
    %38 = math.exp %37 : vector<2x20xf32>
    %cst_23 = arith.constant dense<0.000000e+00> : vector<2xf32>
    %39 = vector.multi_reduction <add>, %38, %cst_23 [1] : vector<2x20xf32> to vector<2xf32>
    %40 = vector.shape_cast %39 : vector<2xf32> to vector<2x1xf32>
    %41 = math.log %40 : vector<2x1xf32>
    %42 = vector.broadcast %41 : vector<2x1xf32> to vector<2x20xf32>
    %43 = arith.subf %37, %42 : vector<2x20xf32>
    %c2 = arith.constant 2 : index
    %c0_24 = arith.constant 0 : index
    %44 = vector.load %arg8[%c2, %c0_24] : memref<16x20xf32, #tpu.memory_space<vmem>>, vector<2x20xf32>
    tpu.vector_store %arg8[%c2, %c0_24], %43 {strides = array<i32>} : memref<16x20xf32, #tpu.memory_space<vmem>>, vector<2x20xf32>,
    %45 = vector.extract_strided_slice %5 {offsets = [2, 0], sizes = [2, 32], strides = [1, 1]} : vector<16x32xf32> to vector<2x32xf32>
    %cst_25 = arith.constant dense<0.000000e+00> : vector<2x32xf32>
    %46 = tpu.matmul %30, %11, %cst_25 {dimension_numbers = #tpu.dot_dimension_numbers<[1], [0], [0], [1], [0, 0, 1, 1], [], []>} : vector<2x32xf32>, vector<32x32xf32>, vector<2x32xf32> -> vector<2x32xf32>
    %47 = arith.addf %45, %46 : vector<2x32xf32>
    %48 = vector.extract_strided_slice %10 {offsets = [4, 0], sizes = [2, 20], strides = [1, 1]} : vector<16x20xf32> to vector<2x20xf32>
    %cst_26 = arith.constant dense<0.000000e+00> : vector<2x20xf32>
    %49 = tpu.matmul %47, %12, %cst_26 {dimension_numbers = #tpu.dot_dimension_numbers<[1], [0], [0], [1], [0, 0, 1, 1], [], []>} : vector<2x32xf32>, vector<32x20xf32>, vector<2x20xf32> -> vector<2x20xf32>
    %50 = arith.addf %48, %49 : vector<2x20xf32>
    %cst_27 = arith.constant dense<0xFF800000> : vector<2xf32>
    %51 = vector.multi_reduction <maximumf>, %50, %cst_27 [1] : vector<2x20xf32> to vector<2xf32>
    %52 = vector.shape_cast %51 : vector<2xf32> to vector<2x1xf32>
    %53 = vector.broadcast %52 : vector<2x1xf32> to vector<2x20xf32>
    %54 = arith.subf %50, %53 : vector<2x20xf32>
    %55 = math.exp %54 : vector<2x20xf32>
    %cst_28 = arith.constant dense<0.000000e+00> : vector<2xf32>
    %56 = vector.multi_reduction <add>, %55, %cst_28 [1] : vector<2x20xf32> to vector<2xf32>
    %57 = vector.shape_cast %56 : vector<2xf32> to vector<2x1xf32>
    %58 = math.log %57 : vector<2x1xf32>
    %59 = vector.broadcast %58 : vector<2x1xf32> to vector<2x20xf32>
    %60 = arith.subf %54, %59 : vector<2x20xf32>
    %c4 = arith.constant 4 : index
    %c0_29 = arith.constant 0 : index
    %61 = vector.load %arg8[%c4, %c0_29] : memref<16x20xf32, #tpu.memory_space<vmem>>, vector<2x20xf32>
    tpu.vector_store %arg8[%c4, %c0_29], %60 {strides = array<i32>} : memref<16x20xf32, #tpu.memory_space<vmem>>, vector<2x20xf32>,
    %62 = vector.extract_strided_slice %5 {offsets = [4, 0], sizes = [2, 32], strides = [1, 1]} : vector<16x32xf32> to vector<2x32xf32>
    %cst_30 = arith.constant dense<0.000000e+00> : vector<2x32xf32>
    %63 = tpu.matmul %47, %11, %cst_30 {dimension_numbers = #tpu.dot_dimension_numbers<[1], [0], [0], [1], [0, 0, 1, 1], [], []>} : vector<2x32xf32>, vector<32x32xf32>, vector<2x32xf32> -> vector<2x32xf32>
    %64 = arith.addf %62, %63 : vector<2x32xf32>
    %65 = vector.extract_strided_slice %10 {offsets = [6, 0], sizes = [2, 20], strides = [1, 1]} : vector<16x20xf32> to vector<2x20xf32>
    %cst_31 = arith.constant dense<0.000000e+00> : vector<2x20xf32>
    %66 = tpu.matmul %64, %12, %cst_31 {dimension_numbers = #tpu.dot_dimension_numbers<[1], [0], [0], [1], [0, 0, 1, 1], [], []>} : vector<2x32xf32>, vector<32x20xf32>, vector<2x20xf32> -> vector<2x20xf32>
    %67 = arith.addf %65, %66 : vector<2x20xf32>
    %cst_32 = arith.constant dense<0xFF800000> : vector<2xf32>
    %68 = vector.multi_reduction <maximumf>, %67, %cst_32 [1] : vector<2x20xf32> to vector<2xf32>
    %69 = vector.shape_cast %68 : vector<2xf32> to vector<2x1xf32>
    %70 = vector.broadcast %69 : vector<2x1xf32> to vector<2x20xf32>
    %71 = arith.subf %67, %70 : vector<2x20xf32>
    %72 = math.exp %71 : vector<2x20xf32>
    %cst_33 = arith.constant dense<0.000000e+00> : vector<2xf32>
    %73 = vector.multi_reduction <add>, %72, %cst_33 [1] : vector<2x20xf32> to vector<2xf32>
    %74 = vector.shape_cast %73 : vector<2xf32> to vector<2x1xf32>
    %75 = math.log %74 : vector<2x1xf32>
    %76 = vector.broadcast %75 : vector<2x1xf32> to vector<2x20xf32>
    %77 = arith.subf %71, %76 : vector<2x20xf32>
    %c6 = arith.constant 6 : index
    %c0_34 = arith.constant 0 : index
    %78 = vector.load %arg8[%c6, %c0_34] : memref<16x20xf32, #tpu.memory_space<vmem>>, vector<2x20xf32>
    tpu.vector_store %arg8[%c6, %c0_34], %77 {strides = array<i32>} : memref<16x20xf32, #tpu.memory_space<vmem>>, vector<2x20xf32>,
    %79 = vector.extract_strided_slice %5 {offsets = [6, 0], sizes = [2, 32], strides = [1, 1]} : vector<16x32xf32> to vector<2x32xf32>
    %cst_35 = arith.constant dense<0.000000e+00> : vector<2x32xf32>
    %80 = tpu.matmul %64, %11, %cst_35 {dimension_numbers = #tpu.dot_dimension_numbers<[1], [0], [0], [1], [0, 0, 1, 1], [], []>} : vector<2x32xf32>, vector<32x32xf32>, vector<2x32xf32> -> vector<2x32xf32>
    %81 = arith.addf %79, %80 : vector<2x32xf32>
    %82 = vector.extract_strided_slice %10 {offsets = [8, 0], sizes = [2, 20], strides = [1, 1]} : vector<16x20xf32> to vector<2x20xf32>
    %cst_36 = arith.constant dense<0.000000e+00> : vector<2x20xf32>
    %83 = tpu.matmul %81, %12, %cst_36 {dimension_numbers = #tpu.dot_dimension_numbers<[1], [0], [0], [1], [0, 0, 1, 1], [], []>} : vector<2x32xf32>, vector<32x20xf32>, vector<2x20xf32> -> vector<2x20xf32>
    %84 = arith.addf %82, %83 : vector<2x20xf32>
    %cst_37 = arith.constant dense<0xFF800000> : vector<2xf32>
    %85 = vector.multi_reduction <maximumf>, %84, %cst_37 [1] : vector<2x20xf32> to vector<2xf32>
    %86 = vector.shape_cast %85 : vector<2xf32> to vector<2x1xf32>
    %87 = vector.broadcast %86 : vector<2x1xf32> to vector<2x20xf32>
    %88 = arith.subf %84, %87 : vector<2x20xf32>
    %89 = math.exp %88 : vector<2x20xf32>
    %cst_38 = arith.constant dense<0.000000e+00> : vector<2xf32>
    %90 = vector.multi_reduction <add>, %89, %cst_38 [1] : vector<2x20xf32> to vector<2xf32>
    %91 = vector.shape_cast %90 : vector<2xf32> to vector<2x1xf32>
    %92 = math.log %91 : vector<2x1xf32>
    %93 = vector.broadcast %92 : vector<2x1xf32> to vector<2x20xf32>
    %94 = arith.subf %88, %93 : vector<2x20xf32>
    %c8 = arith.constant 8 : index
    %c0_39 = arith.constant 0 : index
    %95 = vector.load %arg8[%c8, %c0_39] : memref<16x20xf32, #tpu.memory_space<vmem>>, vector<2x20xf32>
    tpu.vector_store %arg8[%c8, %c0_39], %94 {strides = array<i32>} : memref<16x20xf32, #tpu.memory_space<vmem>>, vector<2x20xf32>,
    %96 = vector.extract_strided_slice %5 {offsets = [8, 0], sizes = [2, 32], strides = [1, 1]} : vector<16x32xf32> to vector<2x32xf32>
    %cst_40 = arith.constant dense<0.000000e+00> : vector<2x32xf32>
    %97 = tpu.matmul %81, %11, %cst_40 {dimension_numbers = #tpu.dot_dimension_numbers<[1], [0], [0], [1], [0, 0, 1, 1], [], []>} : vector<2x32xf32>, vector<32x32xf32>, vector<2x32xf32> -> vector<2x32xf32>
    %98 = arith.addf %96, %97 : vector<2x32xf32>
    %99 = vector.extract_strided_slice %10 {offsets = [10, 0], sizes = [2, 20], strides = [1, 1]} : vector<16x20xf32> to vector<2x20xf32>
    %cst_41 = arith.constant dense<0.000000e+00> : vector<2x20xf32>
    %100 = tpu.matmul %98, %12, %cst_41 {dimension_numbers = #tpu.dot_dimension_numbers<[1], [0], [0], [1], [0, 0, 1, 1], [], []>} : vector<2x32xf32>, vector<32x20xf32>, vector<2x20xf32> -> vector<2x20xf32>
    %101 = arith.addf %99, %100 : vector<2x20xf32>
    %cst_42 = arith.constant dense<0xFF800000> : vector<2xf32>
    %102 = vector.multi_reduction <maximumf>, %101, %cst_42 [1] : vector<2x20xf32> to vector<2xf32>
    %103 = vector.shape_cast %102 : vector<2xf32> to vector<2x1xf32>
    %104 = vector.broadcast %103 : vector<2x1xf32> to vector<2x20xf32>
    %105 = arith.subf %101, %104 : vector<2x20xf32>
    %106 = math.exp %105 : vector<2x20xf32>
    %cst_43 = arith.constant dense<0.000000e+00> : vector<2xf32>
    %107 = vector.multi_reduction <add>, %106, %cst_43 [1] : vector<2x20xf32> to vector<2xf32>
    %108 = vector.shape_cast %107 : vector<2xf32> to vector<2x1xf32>
    %109 = math.log %108 : vector<2x1xf32>
    %110 = vector.broadcast %109 : vector<2x1xf32> to vector<2x20xf32>
    %111 = arith.subf %105, %110 : vector<2x20xf32>
    %c10 = arith.constant 10 : index
    %c0_44 = arith.constant 0 : index
    %112 = vector.load %arg8[%c10, %c0_44] : memref<16x20xf32, #tpu.memory_space<vmem>>, vector<2x20xf32>
    tpu.vector_store %arg8[%c10, %c0_44], %111 {strides = array<i32>} : memref<16x20xf32, #tpu.memory_space<vmem>>, vector<2x20xf32>,
    %113 = vector.extract_strided_slice %5 {offsets = [10, 0], sizes = [2, 32], strides = [1, 1]} : vector<16x32xf32> to vector<2x32xf32>
    %cst_45 = arith.constant dense<0.000000e+00> : vector<2x32xf32>
    %114 = tpu.matmul %98, %11, %cst_45 {dimension_numbers = #tpu.dot_dimension_numbers<[1], [0], [0], [1], [0, 0, 1, 1], [], []>} : vector<2x32xf32>, vector<32x32xf32>, vector<2x32xf32> -> vector<2x32xf32>
    %115 = arith.addf %113, %114 : vector<2x32xf32>
    %116 = vector.extract_strided_slice %10 {offsets = [12, 0], sizes = [2, 20], strides = [1, 1]} : vector<16x20xf32> to vector<2x20xf32>
    %cst_46 = arith.constant dense<0.000000e+00> : vector<2x20xf32>
    %117 = tpu.matmul %115, %12, %cst_46 {dimension_numbers = #tpu.dot_dimension_numbers<[1], [0], [0], [1], [0, 0, 1, 1], [], []>} : vector<2x32xf32>, vector<32x20xf32>, vector<2x20xf32> -> vector<2x20xf32>
    %118 = arith.addf %116, %117 : vector<2x20xf32>
    %cst_47 = arith.constant dense<0xFF800000> : vector<2xf32>
    %119 = vector.multi_reduction <maximumf>, %118, %cst_47 [1] : vector<2x20xf32> to vector<2xf32>
    %120 = vector.shape_cast %119 : vector<2xf32> to vector<2x1xf32>
    %121 = vector.broadcast %120 : vector<2x1xf32> to vector<2x20xf32>
    %122 = arith.subf %118, %121 : vector<2x20xf32>
    %123 = math.exp %122 : vector<2x20xf32>
    %cst_48 = arith.constant dense<0.000000e+00> : vector<2xf32>
    %124 = vector.multi_reduction <add>, %123, %cst_48 [1] : vector<2x20xf32> to vector<2xf32>
    %125 = vector.shape_cast %124 : vector<2xf32> to vector<2x1xf32>
    %126 = math.log %125 : vector<2x1xf32>
    %127 = vector.broadcast %126 : vector<2x1xf32> to vector<2x20xf32>
    %128 = arith.subf %122, %127 : vector<2x20xf32>
    %c12 = arith.constant 12 : index
    %c0_49 = arith.constant 0 : index
    %129 = vector.load %arg8[%c12, %c0_49] : memref<16x20xf32, #tpu.memory_space<vmem>>, vector<2x20xf32>
    tpu.vector_store %arg8[%c12, %c0_49], %128 {strides = array<i32>} : memref<16x20xf32, #tpu.memory_space<vmem>>, vector<2x20xf32>,
    %130 = vector.extract_strided_slice %5 {offsets = [12, 0], sizes = [2, 32], strides = [1, 1]} : vector<16x32xf32> to vector<2x32xf32>
    %cst_50 = arith.constant dense<0.000000e+00> : vector<2x32xf32>
    %131 = tpu.matmul %115, %11, %cst_50 {dimension_numbers = #tpu.dot_dimension_numbers<[1], [0], [0], [1], [0, 0, 1, 1], [], []>} : vector<2x32xf32>, vector<32x32xf32>, vector<2x32xf32> -> vector<2x32xf32>
    %132 = arith.addf %130, %131 : vector<2x32xf32>
    %133 = vector.extract_strided_slice %10 {offsets = [14, 0], sizes = [2, 20], strides = [1, 1]} : vector<16x20xf32> to vector<2x20xf32>
    %cst_51 = arith.constant dense<0.000000e+00> : vector<2x20xf32>
    %134 = tpu.matmul %132, %12, %cst_51 {dimension_numbers = #tpu.dot_dimension_numbers<[1], [0], [0], [1], [0, 0, 1, 1], [], []>} : vector<2x32xf32>, vector<32x20xf32>, vector<2x20xf32> -> vector<2x20xf32>
    %135 = arith.addf %133, %134 : vector<2x20xf32>
    %cst_52 = arith.constant dense<0xFF800000> : vector<2xf32>
    %136 = vector.multi_reduction <maximumf>, %135, %cst_52 [1] : vector<2x20xf32> to vector<2xf32>
    %137 = vector.shape_cast %136 : vector<2xf32> to vector<2x1xf32>
    %138 = vector.broadcast %137 : vector<2x1xf32> to vector<2x20xf32>
    %139 = arith.subf %135, %138 : vector<2x20xf32>
    %140 = math.exp %139 : vector<2x20xf32>
    %cst_53 = arith.constant dense<0.000000e+00> : vector<2xf32>
    %141 = vector.multi_reduction <add>, %140, %cst_53 [1] : vector<2x20xf32> to vector<2xf32>
    %142 = vector.shape_cast %141 : vector<2xf32> to vector<2x1xf32>
    %143 = math.log %142 : vector<2x1xf32>
    %144 = vector.broadcast %143 : vector<2x1xf32> to vector<2x20xf32>
    %145 = arith.subf %139, %144 : vector<2x20xf32>
    %c14 = arith.constant 14 : index
    %c0_54 = arith.constant 0 : index
    %146 = vector.load %arg8[%c14, %c0_54] : memref<16x20xf32, #tpu.memory_space<vmem>>, vector<2x20xf32>
    tpu.vector_store %arg8[%c14, %c0_54], %145 {strides = array<i32>} : memref<16x20xf32, #tpu.memory_space<vmem>>, vector<2x20xf32>,
    %147 = vector.extract_strided_slice %5 {offsets = [14, 0], sizes = [2, 32], strides = [1, 1]} : vector<16x32xf32> to vector<2x32xf32>
    %cst_55 = arith.constant dense<0.000000e+00> : vector<2x32xf32>
    %148 = tpu.matmul %132, %11, %cst_55 {dimension_numbers = #tpu.dot_dimension_numbers<[1], [0], [0], [1], [0, 0, 1, 1], [], []>} : vector<2x32xf32>, vector<32x32xf32>, vector<2x32xf32> -> vector<2x32xf32>
    %149 = arith.addf %147, %148 : vector<2x32xf32>
    %c0_56 = arith.constant 0 : index
    %c0_57 = arith.constant 0 : index
    %150 = vector.load %arg9[%c0_56, %c0_57] : memref<2x32xf32, #tpu.memory_space<vmem>>, vector<2x32xf32>
    tpu.vector_store %arg9[%c0_56, %c0_57], %149 {strides = array<i32>} : memref<2x32xf32, #tpu.memory_space<vmem>>, vector<2x32xf32>,
    return
  }
  func.func @transform_0(%arg0: i32) -> (i32, i32) {
    %c0_i32 = arith.constant 0 : i32
    %c0_i32_0 = arith.constant 0 : i32
    %c0_i32_1 = arith.constant 0 : i32
    return %c0_i32, %c0_i32_0 : i32, i32
  }
  func.func @transform_1(%arg0: i32) -> (i32, i32) {
    %c0_i32 = arith.constant 0 : i32
    %c0_i32_0 = arith.constant 0 : i32
    %c0_i32_1 = arith.constant 0 : i32
    return %c0_i32, %c0_i32_0 : i32, i32
  }
  func.func @transform_2(%arg0: i32) -> (i32, i32) {
    %c0_i32 = arith.constant 0 : i32
    %c0_i32_0 = arith.constant 0 : i32
    %c0_i32_1 = arith.constant 0 : i32
    return %c0_i32, %c0_i32_0 : i32, i32
  }
  func.func @transform_3(%arg0: i32) -> (i32, i32) {
    %c0_i32 = arith.constant 0 : i32
    %c0_i32_0 = arith.constant 0 : i32
    %c0_i32_1 = arith.constant 0 : i32
    return %c0_i32, %c0_i32_0 : i32, i32
  }
  func.func @transform_4(%arg0: i32) -> (i32, i32) {
    %c0_i32 = arith.constant 0 : i32
    %c0_i32_0 = arith.constant 0 : i32
    %c0_i32_1 = arith.constant 0 : i32
    return %c0_i32, %c0_i32_0 : i32, i32
  }
  func.func @transform_5(%arg0: i32) -> (i32, i32) {
    %c0_i32 = arith.constant 0 : i32
    %c0_i32_0 = arith.constant 0 : i32
    %c0_i32_1 = arith.constant 0 : i32
    return %c0_i32, %c0_i32_0 : i32, i32
  }
  func.func @transform_6(%arg0: i32) -> (i32, i32) {
    %c0_i32 = arith.constant 0 : i32
    %c0_i32_0 = arith.constant 0 : i32
    %c0_i32_1 = arith.constant 0 : i32
    return %c0_i32, %c0_i32_0 : i32, i32
  }
  func.func @transform_7(%arg0: i32) -> (i32, i32) {
    %c0_i32 = arith.constant 0 : i32
    %c0_i32_0 = arith.constant 0 : i32
    %c0_i32_1 = arith.constant 0 : i32
    return %c0_i32, %c0_i32_0 : i32, i32
  }
  func.func @transform_8(%arg0: i32) -> (i32, i32) {
    %c0_i32 = arith.constant 0 : i32
    %c0_i32_0 = arith.constant 0 : i32
    %c0_i32_1 = arith.constant 0 : i32
    return %c0_i32, %c0_i32_0 : i32, i32
  }
}

</mosaic_0001>

<llo_original>
// kernel: tpu_custom_call.1
$region0: #{tpu_custom_call.1}
  #allocation0 [shape = 'u32[]', space=smem, size = 0x4, offset = 0x4, fixed_abs, tag = 'smem constant byte address 0x4 - core index']
  #allocation1 [shape = 'u32[144,128]{1,0:T(1,128)}', space=vmem, size = 0x12000, scoped, tag = 'internal scratch']
  %s0 = inlined_call_operand.vmem [shape: f32[16,50], index: 0, kind: input, shape index: {}]
  %s1 = inlined_call_operand.vmem [shape: f32[50,32], index: 1, kind: input, shape index: {}]
  %s2 = inlined_call_operand.vmem [shape: f32[32,32], index: 2, kind: input, shape index: {}]
  %s3 = inlined_call_operand.vmem [shape: f32[1,32], index: 3, kind: input, shape index: {}]
  %s4 = inlined_call_operand.vmem [shape: f32[50,20], index: 4, kind: input, shape index: {}]
  %s5 = inlined_call_operand.vmem [shape: f32[32,20], index: 5, kind: input, shape index: {}]
  %s6 = inlined_call_operand.vmem [shape: f32[1,20], index: 6, kind: input, shape index: {}]
  %s7 = inlined_call_operand.hbm [shape: f32[16,20], index: 7, kind: output, shape index: {0}]
  %s8 = inlined_call_operand.hbm [shape: f32[2,32], index: 8, kind: output, shape index: {1}]
  %9 = xla_tuple %s7, %s8
  %s10 = sld [smem:[#allocation0]]
  $region46: #{tpu_custom_call.1} parent=0
    _
  %s12 = ssub.s32 1, %s10
  %s13 = scalar_select 0, %s12, %s10
  $region1: #{tpu_custom_call.1} parent=0
    #allocation2 [shape = 'u8[8192]{0}', space=vmem, size = 0x2000, scoped, tag = 'output window, operand 0, single buffered']
    #allocation3 [shape = 's32[1]{0}', space=sflag, size = 0x4, scoped, tag = 'scoped memory for tpu_custom_call.1']
    #allocation4 [shape = 'u8[1024]{0}', space=vmem, size = 0x400, scoped, tag = 'output window, operand 1, single buffered']
    #allocation5 [shape = 's32[1]{0}', space=sflag, size = 0x4, scoped, tag = 'scoped memory for tpu_custom_call.1']
    %14 = vsyncpa [#allocation3], 0
    %15 = vsyncpa [#allocation5], 0
    // Predicated region
    $region2: #{tpu_custom_call.1} parent=1 // pred_check
      _
    $region3: #{tpu_custom_call.1} parent=1 // pred_check_branch
      %17 = sbr.rel (0) target = $region5
    $region4: #{tpu_custom_call.1} parent=1 // pred_region
      _
    $region5: #{tpu_custom_call.1} parent=1 // pred_fallthru
      _
    // Predicated region
    $region6: #{tpu_custom_call.1} parent=1 // pred_check
      _
    $region7: #{tpu_custom_call.1} parent=1 // pred_check_branch
      %19 = sbr.rel (0) target = $region9
    $region8: #{tpu_custom_call.1} parent=1 // pred_region
      _
    $region9: #{tpu_custom_call.1} parent=1 // pred_fallthru
      _
    // Predicated region
    $region10: #{tpu_custom_call.1} parent=1 // pred_check
      _
    $region11: #{tpu_custom_call.1} parent=1 // pred_check_branch
      %21 = sbr.rel (0) target = $region13
    $region12: #{tpu_custom_call.1} parent=1 // pred_region
      _
    $region13: #{tpu_custom_call.1} parent=1 // pred_fallthru
      _
    // Predicated region
    $region14: #{tpu_custom_call.1} parent=1 // pred_check
      _
    $region15: #{tpu_custom_call.1} parent=1 // pred_check_branch
      %23 = sbr.rel (0) target = $region17
    $region16: #{tpu_custom_call.1} parent=1 // pred_region
      _
    $region17: #{tpu_custom_call.1} parent=1 // pred_fallthru
      _
    // Predicated region
    $region18: #{tpu_custom_call.1} parent=1 // pred_check
      _
    $region19: #{tpu_custom_call.1} parent=1 // pred_check_branch
      %25 = sbr.rel (0) target = $region21
    $region20: #{tpu_custom_call.1} parent=1 // pred_region
      _
    $region21: #{tpu_custom_call.1} parent=1 // pred_fallthru
      _
    // Predicated region
    $region22: #{tpu_custom_call.1} parent=1 // pred_check
      _
    $region23: #{tpu_custom_call.1} parent=1 // pred_check_branch
      %27 = sbr.rel (0) target = $region25
    $region24: #{tpu_custom_call.1} parent=1 // pred_region
      _
    $region25: #{tpu_custom_call.1} parent=1 // pred_fallthru
      _
    // Predicated region
    $region26: #{tpu_custom_call.1} parent=1 // pred_check
      _
    $region27: #{tpu_custom_call.1} parent=1 // pred_check_branch
      %29 = sbr.rel (0) target = $region29
    $region28: #{tpu_custom_call.1} parent=1 // pred_region
      _
    $region29: #{tpu_custom_call.1} parent=1 // pred_fallthru
      _
    %v30 = vld [vmem:[%s0] sm:$0xff]
    %v31 = vld [vmem:[%s0 + $0x8] sm:$0xff]
    %v32 = vld [vmem:[%s1] sm:$0xff]
    %v33 = vld [vmem:[%s1 + $0x8] sm:$0xff]
    %v34 = vld [vmem:[%s1 + $0x10] sm:$0xff]
    %v35 = vld [vmem:[%s1 + $0x18] sm:$0xff]
    %v36 = vld [vmem:[%s1 + $0x20] sm:$0xff]
    %v37 = vld [vmem:[%s1 + $0x28] sm:$0xff]
    %v38 = vld [vmem:[%s1 + $0x30] sm:$0x3]
    %v39 = vld [vmem:[%s3] sm:$0x1]
    %v41 = vlaneseq
    %v42 = vshrl.u32 %v41, 7
    %v43 = vsub.s32 0, %v42
    %v44 = vrot.slane %v39, %v43
    %vm46 = vcmask 408576
    %v48 = vsel %vm46, %v30, 0
    %v51 = vsel %vm46, %v31, 0
    %vm53 = vcmask 1041408
    %v55 = vsel %vm53, %v38, 0
    %57 = vmatprep.subr.mxu0 0.0
    %58 = vmatpush1.msra.mxu0 %v32
    %59 = vmatprep.subr.mxu0 0.0
    %60 = vmatpush1.msra.mxu0 %v33
    %61 = vmatprep.subr.mxu0 0.0
    %62 = vmatpush1.msra.mxu0 %v34
    %63 = vmatprep.subr.mxu0 0.0
    %64 = vmatpush1.msra.mxu0 %v35
    %65 = vmatprep.subr.mxu0 0.0
    %66 = vmatpush1.msra.mxu0 %v36
    %67 = vmatprep.subr.mxu0 0.0
    %68 = vmatpush1.msra.mxu0 %v37
    %69 = vmatprep.subr.mxu0 0.0
    %70 = vmatpush1.msra.mxu0 %v55
    %71 = vmatprep.subr.mxu0 0.0
    %72 = vmatpush1.msra.mxu0 0.0
    %73 = vmatprep.subr.mxu0 0.0
    %74 = vmatpush1.msra.mxu0 0.0
    %75 = vmatprep.subr.mxu0 0.0
    %76 = vmatpush1.msra.mxu0 0.0
    %77 = vmatprep.subr.mxu0 0.0
    %78 = vmatpush1.msra.mxu0 0.0
    %79 = vmatprep.subr.mxu0 0.0
    %80 = vmatpush1.msra.mxu0 0.0
    %81 = vmatprep.subr.mxu0 0.0
    %82 = vmatpush1.msra.mxu0 0.0
    %83 = vmatprep.subr.mxu0 0.0
    %84 = vmatpush1.msra.mxu0 0.0
    %85 = vmatprep.subr.mxu0 0.0
    %86 = vmatpush1.msra.mxu0 0.0
    %87 = vmatprep.subr.mxu0 0.0
    %88 = vmatpush1.msra.mxu0 0.0
    %89 = vmatprep.subr.mxu0 0.0
    %90 = vmatpush1.msra.mxu0 0.0
    %91 = vmatprep.subr.mxu0 0.0
    %92 = vmatpush1.msra.mxu0 0.0
    %93 = vmatprep.subr.mxu0 0.0
    %94 = vmatpush1.msra.mxu0 0.0
    %95 = vmatprep.subr.mxu0 0.0
    %96 = vmatpush1.msra.mxu0 0.0
    %97 = vmatprep.subr.mxu0 0.0
    %98 = vmatpush1.msra.mxu0 0.0
    %99 = vmatprep.subr.mxu0 0.0
    %100 = vmatpush1.msra.mxu0 0.0
    %101 = vmatprep.subr.mxu0 0.0
    %102 = vmatpush1.msra.mxu0 0.0
    %103 = vmatprep.subr.mxu0 0.0
    %104 = vmatpush1.msra.mxu0 0.0
    %105 = vmatprep.subr.mxu0 0.0
    %106 = vmatpush1.msra.mxu0 0.0
    %107 = vmatprep.subr.mxu0 0.0
    %108 = vmatpush1.msra.mxu0 0.0
    %109 = vmatprep.subr.mxu0 0.0
    %110 = vmatpush1.msra.mxu0 0.0
    %111 = vmatprep.subr.mxu0 0.0
    %112 = vmatpush1.msra.mxu0 0.0
    %113 = vmatprep.subr.mxu0 0.0
    %114 = vmatpush1.msra.mxu0 0.0
    %115 = vmatprep.subr.mxu0 0.0
    %116 = vmatpush1.msra.mxu0 0.0
    %117 = vmatprep.subr.mxu0 0.0
    %118 = vmatpush1.msra.mxu0 0.0
    %119 = vmatprep.subr.mxu0 0.0
    %120 = vmatpush1.msra.mxu0 0.0
    %121 = vmatprep.mubr.f32.mxu0 0.0
    %122 = vmatmul.mubr.f32.gmra.mrb[0].mxu0 %v48
    %v123 = vpop.f32.mrb[0].mxu0
    %v124 = vadd.f32 %v44, %v123
    %v125 = vpop.f32.mrb[0].mxu0
    %126 = vmatprep.mubr.f32.mxu0 0.0
    %127 = vmatmul.mubr.f32.gmra.mrb[0].mxu0 %v51
    %v128 = vpop.f32.mrb[0].mxu0
    %v129 = vadd.f32 %v44, %v128
    %v130 = vpop.f32.mrb[0].mxu0
    %131 = vdwg.mxu0
    %v132 = vld [vmem:[%s4] sm:$0xff]
    %v133 = vld [vmem:[%s4 + $0x8] sm:$0xff]
    %v134 = vld [vmem:[%s4 + $0x10] sm:$0xff]
    %v135 = vld [vmem:[%s4 + $0x18] sm:$0xff]
    %v136 = vld [vmem:[%s4 + $0x20] sm:$0xff]
    %v137 = vld [vmem:[%s4 + $0x28] sm:$0xff]
    %v138 = vld [vmem:[%s4 + $0x30] sm:$0x3]
    %v139 = vld [vmem:[%s6] sm:$0x1]
    %v141 = vlaneseq
    %v142 = vshrl.u32 %v141, 7
    %v143 = vsub.s32 0, %v142
    %v144 = vrot.slane %v139, %v143
    %v147 = vsel %vm53, %v138, 0
    %149 = vmatprep.subr.mxu0 0.0
    %150 = vmatpush1.msra.mxu0 %v132
    %151 = vmatprep.subr.mxu0 0.0
    %152 = vmatpush1.msra.mxu0 %v133
    %153 = vmatprep.subr.mxu0 0.0
    %154 = vmatpush1.msra.mxu0 %v134
    %155 = vmatprep.subr.mxu0 0.0
    %156 = vmatpush1.msra.mxu0 %v135
    %157 = vmatprep.subr.mxu0 0.0
    %158 = vmatpush1.msra.mxu0 %v136
    %159 = vmatprep.subr.mxu0 0.0
    %160 = vmatpush1.msra.mxu0 %v137
    %161 = vmatprep.subr.mxu0 0.0
    %162 = vmatpush1.msra.mxu0 %v147
    %163 = vmatprep.subr.mxu0 0.0
    %164 = vmatpush1.msra.mxu0 0.0
    %165 = vmatprep.subr.mxu0 0.0
    %166 = vmatpush1.msra.mxu0 0.0
    %167 = vmatprep.subr.mxu0 0.0
    %168 = vmatpush1.msra.mxu0 0.0
    %169 = vmatprep.subr.mxu0 0.0
    %170 = vmatpush1.msra.mxu0 0.0
    %171 = vmatprep.subr.mxu0 0.0
    %172 = vmatpush1.msra.mxu0 0.0
    %173 = vmatprep.subr.mxu0 0.0
    %174 = vmatpush1.msra.mxu0 0.0
    %175 = vmatprep.subr.mxu0 0.0
    %176 = vmatpush1.msra.mxu0 0.0
    %177 = vmatprep.subr.mxu0 0.0
    %178 = vmatpush1.msra.mxu0 0.0
    %179 = vmatprep.subr.mxu0 0.0
    %180 = vmatpush1.msra.mxu0 0.0
    %181 = vmatprep.subr.mxu0 0.0
    %182 = vmatpush1.msra.mxu0 0.0
    %183 = vmatprep.subr.mxu0 0.0
    %184 = vmatpush1.msra.mxu0 0.0
    %185 = vmatprep.subr.mxu0 0.0
    %186 = vmatpush1.msra.mxu0 0.0
    %187 = vmatprep.subr.mxu0 0.0
    %188 = vmatpush1.msra.mxu0 0.0
    %189 = vmatprep.subr.mxu0 0.0
    %190 = vmatpush1.msra.mxu0 0.0
    %191 = vmatprep.subr.mxu0 0.0
    %192 = vmatpush1.msra.mxu0 0.0
    %193 = vmatprep.subr.mxu0 0.0
    %194 = vmatpush1.msra.mxu0 0.0
    %195 = vmatprep.subr.mxu0 0.0
    %196 = vmatpush1.msra.mxu0 0.0
    %197 = vmatprep.subr.mxu0 0.0
    %198 = vmatpush1.msra.mxu0 0.0
    %199 = vmatprep.subr.mxu0 0.0
    %200 = vmatpush1.msra.mxu0 0.0
    %201 = vmatprep.subr.mxu0 0.0
    %202 = vmatpush1.msra.mxu0 0.0
    %203 = vmatprep.subr.mxu0 0.0
    %204 = vmatpush1.msra.mxu0 0.0
    %205 = vmatprep.subr.mxu0 0.0
    %206 = vmatpush1.msra.mxu0 0.0
    %207 = vmatprep.subr.mxu0 0.0
    %208 = vmatpush1.msra.mxu0 0.0
    %209 = vmatprep.subr.mxu0 0.0
    %210 = vmatpush1.msra.mxu0 0.0
    %211 = vmatprep.subr.mxu0 0.0
    %212 = vmatpush1.msra.mxu0 0.0
    %213 = vmatprep.mubr.f32.mxu0 0.0
    %214 = vmatmul.mubr.f32.gmra.mrb[0].mxu0 %v48
    %v215 = vpop.f32.mrb[0].mxu0
    %v216 = vadd.f32 %v144, %v215
    %v217 = vpop.f32.mrb[0].mxu0
    %218 = vmatprep.mubr.f32.mxu0 0.0
    %219 = vmatmul.mubr.f32.gmra.mrb[0].mxu0 %v51
    %v220 = vpop.f32.mrb[0].mxu0
    %v221 = vadd.f32 %v144, %v220
    %v222 = vpop.f32.mrb[0].mxu0
    %223 = vdwg.mxu0
    %v224 = vld [vmem:[%s2] sm:$0xff]
    %v225 = vld [vmem:[%s2 + $0x8] sm:$0xff]
    %v226 = vld [vmem:[%s2 + $0x10] sm:$0xff]
    %v227 = vld [vmem:[%s2 + $0x18] sm:$0xff]
    %v228 = vld [vmem:[%s5] sm:$0xff]
    %v229 = vld [vmem:[%s5 + $0x8] sm:$0xff]
    %v230 = vld [vmem:[%s5 + $0x10] sm:$0xff]
    %v231 = vld [vmem:[%s5 + $0x18] sm:$0xff]
    %vm232 = vcmask 261120
    %v234 = vsel %vm232, 0.0, 0
    %236 = vmatprep.subr.mxu0 0.0
    %237 = vmatpush1.msra.mxu0 %v228
    %238 = vmatprep.subr.mxu0 0.0
    %239 = vmatpush1.msra.mxu0 %v229
    %240 = vmatprep.subr.mxu0 0.0
    %241 = vmatpush1.msra.mxu0 %v230
    %242 = vmatprep.subr.mxu0 0.0
    %243 = vmatpush1.msra.mxu0 %v231
    %244 = vmatprep.subr.mxu0 0.0
    %245 = vmatpush1.msra.mxu0 0.0
    %246 = vmatprep.subr.mxu0 0.0
    %247 = vmatpush1.msra.mxu0 0.0
    %248 = vmatprep.subr.mxu0 0.0
    %249 = vmatpush1.msra.mxu0 0.0
    %250 = vmatprep.subr.mxu0 0.0
    %251 = vmatpush1.msra.mxu0 0.0
    %252 = vmatprep.subr.mxu0 0.0
    %253 = vmatpush1.msra.mxu0 0.0
    %254 = vmatprep.subr.mxu0 0.0
    %255 = vmatpush1.msra.mxu0 0.0
    %256 = vmatprep.subr.mxu0 0.0
    %257 = vmatpush1.msra.mxu0 0.0
    %258 = vmatprep.subr.mxu0 0.0
    %259 = vmatpush1.msra.mxu0 0.0
    %260 = vmatprep.subr.mxu0 0.0
    %261 = vmatpush1.msra.mxu0 0.0
    %262 = vmatprep.subr.mxu0 0.0
    %263 = vmatpush1.msra.mxu0 0.0
    %264 = vmatprep.subr.mxu0 0.0
    %265 = vmatpush1.msra.mxu0 0.0
    %266 = vmatprep.subr.mxu0 0.0
    %267 = vmatpush1.msra.mxu0 0.0
    %268 = vmatprep.subr.mxu0 0.0
    %269 = vmatpush1.msra.mxu0 0.0
    %270 = vmatprep.subr.mxu0 0.0
    %271 = vmatpush1.msra.mxu0 0.0
    %272 = vmatprep.subr.mxu0 0.0
    %273 = vmatpush1.msra.mxu0 0.0
    %274 = vmatprep.subr.mxu0 0.0
    %275 = vmatpush1.msra.mxu0 0.0
    %276 = vmatprep.subr.mxu0 0.0
    %277 = vmatpush1.msra.mxu0 0.0
    %278 = vmatprep.subr.mxu0 0.0
    %279 = vmatpush1.msra.mxu0 0.0
    %280 = vmatprep.subr.mxu0 0.0
    %281 = vmatpush1.msra.mxu0 0.0
    %282 = vmatprep.subr.mxu0 0.0
    %283 = vmatpush1.msra.mxu0 0.0
    %284 = vmatprep.subr.mxu0 0.0
    %285 = vmatpush1.msra.mxu0 0.0
    %286 = vmatprep.subr.mxu0 0.0
    %287 = vmatpush1.msra.mxu0 0.0
    %288 = vmatprep.subr.mxu0 0.0
    %289 = vmatpush1.msra.mxu0 0.0
    %290 = vmatprep.subr.mxu0 0.0
    %291 = vmatpush1.msra.mxu0 0.0
    %292 = vmatprep.subr.mxu0 0.0
    %293 = vmatpush1.msra.mxu0 0.0
    %294 = vmatprep.subr.mxu0 0.0
    %295 = vmatpush1.msra.mxu0 0.0
    %296 = vmatprep.subr.mxu0 0.0
    %297 = vmatpush1.msra.mxu0 0.0
    %298 = vmatprep.subr.mxu0 0.0
    %299 = vmatpush1.msra.mxu0 0.0
    %300 = vmatprep.mubr.f32.mxu0 0.0
    %301 = vmatmul.mubr.f32.gmra.mrb[0].mxu0 %v234
    %v302 = vpop.f32.mrb[0].mxu0
    %v303 = vadd.f32 0.0, %v302
    %v304 = vpop.f32.mrb[0].mxu0
    %305 = vdwg.mxu0
    %v306 = vadd.f32 %v216, %v303
    %vm307 = vcmask 156672
    %v308 = vsel %vm307, %v306, -inf
    %309 = vmax.xlane.f32.xlu0 %v308
    %v310 = vpop.xlane.xlu0 %309
    %v311 = vsub.f32 %v306, %v310
    %v312 = vmul.f32 %v311, 1.442695
    %v313 = vpow.pop %v312
    %v314 = vsel %vm307, %v313, 0.0
    %315 = vadd.xlane.f32.xlu0 %v314
    %v316 = vpop.xlane.xlu0 %315
    %v317 = vlog2.pop %v316
    %v318 = vmul.f32 %v317, 0.6931472
    %v319 = vsub.f32 %v311, %v318
    %320 = vst.msk [vmem:[#allocation2] sm:$0x3] %vm307, %v319
    %321 = vmatprep.subr.mxu0 0.0
    %322 = vmatpush1.msra.mxu0 %v224
    %323 = vmatprep.subr.mxu0 0.0
    %324 = vmatpush1.msra.mxu0 %v225
    %325 = vmatprep.subr.mxu0 0.0
    %326 = vmatpush1.msra.mxu0 %v226
    %327 = vmatprep.subr.mxu0 0.0
    %328 = vmatpush1.msra.mxu0 %v227
    %329 = vmatprep.subr.mxu0 0.0
    %330 = vmatpush1.msra.mxu0 0.0
    %331 = vmatprep.subr.mxu0 0.0
    %332 = vmatpush1.msra.mxu0 0.0
    %333 = vmatprep.subr.mxu0 0.0
    %334 = vmatpush1.msra.mxu0 0.0
    %335 = vmatprep.subr.mxu0 0.0
    %336 = vmatpush1.msra.mxu0 0.0
    %337 = vmatprep.subr.mxu0 0.0
    %338 = vmatpush1.msra.mxu0 0.0
    %339 = vmatprep.subr.mxu0 0.0
    %340 = vmatpush1.msra.mxu0 0.0
    %341 = vmatprep.subr.mxu0 0.0
    %342 = vmatpush1.msra.mxu0 0.0
    %343 = vmatprep.subr.mxu0 0.0
    %344 = vmatpush1.msra.mxu0 0.0
    %345 = vmatprep.subr.mxu0 0.0
    %346 = vmatpush1.msra.mxu0 0.0
    %347 = vmatprep.subr.mxu0 0.0
    %348 = vmatpush1.msra.mxu0 0.0
    %349 = vmatprep.subr.mxu0 0.0
    %350 = vmatpush1.msra.mxu0 0.0
    %351 = vmatprep.subr.mxu0 0.0
    %352 = vmatpush1.msra.mxu0 0.0
    %353 = vmatprep.subr.mxu0 0.0
    %354 = vmatpush1.msra.mxu0 0.0
    %355 = vmatprep.subr.mxu0 0.0
    %356 = vmatpush1.msra.mxu0 0.0
    %357 = vmatprep.subr.mxu0 0.0
    %358 = vmatpush1.msra.mxu0 0.0
    %359 = vmatprep.subr.mxu0 0.0
    %360 = vmatpush1.msra.mxu0 0.0
    %361 = vmatprep.subr.mxu0 0.0
    %362 = vmatpush1.msra.mxu0 0.0
    %363 = vmatprep.subr.mxu0 0.0
    %364 = vmatpush1.msra.mxu0 0.0
    %365 = vmatprep.subr.mxu0 0.0
    %366 = vmatpush1.msra.mxu0 0.0
    %367 = vmatprep.subr.mxu0 0.0
    %368 = vmatpush1.msra.mxu0 0.0
    %369 = vmatprep.subr.mxu0 0.0
    %370 = vmatpush1.msra.mxu0 0.0
    %371 = vmatprep.subr.mxu0 0.0
    %372 = vmatpush1.msra.mxu0 0.0
    %373 = vmatprep.subr.mxu0 0.0
    %374 = vmatpush1.msra.mxu0 0.0
    %375 = vmatprep.subr.mxu0 0.0
    %376 = vmatpush1.msra.mxu0 0.0
    %377 = vmatprep.subr.mxu0 0.0
    %378 = vmatpush1.msra.mxu0 0.0
    %379 = vmatprep.subr.mxu0 0.0
    %380 = vmatpush1.msra.mxu0 0.0
    %381 = vmatprep.subr.mxu0 0.0
    %382 = vmatpush1.msra.mxu0 0.0
    %383 = vmatprep.subr.mxu0 0.0
    %384 = vmatpush1.msra.mxu0 0.0
    %385 = vmatprep.mubr.f32.mxu0 0.0
    %386 = vmatmul.mubr.f32.gmra.mrb[0].mxu0 %v234
    %v387 = vpop.f32.mrb[0].mxu0
    %v388 = vadd.f32 0.0, %v387
    %v389 = vpop.f32.mrb[0].mxu0
    %390 = vdwg.mxu0
    %v391 = vadd.f32 %v124, %v388
    %v393 = vsel %vm232, %v391, 0
    %395 = vmatprep.subr.mxu0 0.0
    %396 = vmatpush1.msra.mxu0 %v228
    %397 = vmatprep.subr.mxu0 0.0
    %398 = vmatpush1.msra.mxu0 %v229
    %399 = vmatprep.subr.mxu0 0.0
    %400 = vmatpush1.msra.mxu0 %v230
    %401 = vmatprep.subr.mxu0 0.0
    %402 = vmatpush1.msra.mxu0 %v231
    %403 = vmatprep.subr.mxu0 0.0
    %404 = vmatpush1.msra.mxu0 0.0
    %405 = vmatprep.subr.mxu0 0.0
    %406 = vmatpush1.msra.mxu0 0.0
    %407 = vmatprep.subr.mxu0 0.0
    %408 = vmatpush1.msra.mxu0 0.0
    %409 = vmatprep.subr.mxu0 0.0
    %410 = vmatpush1.msra.mxu0 0.0
    %411 = vmatprep.subr.mxu0 0.0
    %412 = vmatpush1.msra.mxu0 0.0
    %413 = vmatprep.subr.mxu0 0.0
    %414 = vmatpush1.msra.mxu0 0.0
    %415 = vmatprep.subr.mxu0 0.0
    %416 = vmatpush1.msra.mxu0 0.0
    %417 = vmatprep.subr.mxu0 0.0
    %418 = vmatpush1.msra.mxu0 0.0
    %419 = vmatprep.subr.mxu0 0.0
    %420 = vmatpush1.msra.mxu0 0.0
    %421 = vmatprep.subr.mxu0 0.0
    %422 = vmatpush1.msra.mxu0 0.0
    %423 = vmatprep.subr.mxu0 0.0
    %424 = vmatpush1.msra.mxu0 0.0
    %425 = vmatprep.subr.mxu0 0.0
    %426 = vmatpush1.msra.mxu0 0.0
    %427 = vmatprep.subr.mxu0 0.0
    %428 = vmatpush1.msra.mxu0 0.0
    %429 = vmatprep.subr.mxu0 0.0
    %430 = vmatpush1.msra.mxu0 0.0
    %431 = vmatprep.subr.mxu0 0.0
    %432 = vmatpush1.msra.mxu0 0.0
    %433 = vmatprep.subr.mxu0 0.0
    %434 = vmatpush1.msra.mxu0 0.0
    %435 = vmatprep.subr.mxu0 0.0
    %436 = vmatpush1.msra.mxu0 0.0
    %437 = vmatprep.subr.mxu0 0.0
    %438 = vmatpush1.msra.mxu0 0.0
    %439 = vmatprep.subr.mxu0 0.0
    %440 = vmatpush1.msra.mxu0 0.0
    %441 = vmatprep.subr.mxu0 0.0
    %442 = vmatpush1.msra.mxu0 0.0
    %443 = vmatprep.subr.mxu0 0.0
    %444 = vmatpush1.msra.mxu0 0.0
    %445 = vmatprep.subr.mxu0 0.0
    %446 = vmatpush1.msra.mxu0 0.0
    %447 = vmatprep.subr.mxu0 0.0
    %448 = vmatpush1.msra.mxu0 0.0
    %449 = vmatprep.subr.mxu0 0.0
    %450 = vmatpush1.msra.mxu0 0.0
    %451 = vmatprep.subr.mxu0 0.0
    %452 = vmatpush1.msra.mxu0 0.0
    %453 = vmatprep.subr.mxu0 0.0
    %454 = vmatpush1.msra.mxu0 0.0
    %455 = vmatprep.subr.mxu0 0.0
    %456 = vmatpush1.msra.mxu0 0.0
    %457 = vmatprep.subr.mxu0 0.0
    %458 = vmatpush1.msra.mxu0 0.0
    %459 = vmatprep.mubr.f32.mxu0 0.0
    %460 = vmatmul.mubr.f32.gmra.mrb[0].mxu0 %v393
    %v461 = vpop.f32.mrb[0].mxu0
    %v462 = vadd.f32 0.0, %v461
    %v463 = vpop.f32.mrb[0].mxu0
    %464 = vdwg.mxu0
    %v466 = vrot.slane %v462, 6
    %v468 = vadd.f32 %v216, %v466
    %vm469 = vcmask 158722
    %v470 = vsel %vm469, %v468, -inf
    %471 = vmax.xlane.f32.xlu0 %v470
    %v472 = vpop.xlane.xlu0 %471
    %v473 = vsub.f32 %v468, %v472
    %v474 = vmul.f32 %v473, 1.442695
    %v475 = vpow.pop %v474
    %v476 = vsel %vm469, %v475, 0.0
    %477 = vadd.xlane.f32.xlu0 %v476
    %v478 = vpop.xlane.xlu0 %477
    %v479 = vlog2.pop %v478
    %v480 = vmul.f32 %v479, 0.6931472
    %v481 = vsub.f32 %v473, %v480
    %482 = vst.msk [vmem:[#allocation2] sm:$0xc] %vm469, %v481
    %483 = vmatprep.subr.mxu0 0.0
    %484 = vmatpush1.msra.mxu0 %v224
    %485 = vmatprep.subr.mxu0 0.0
    %486 = vmatpush1.msra.mxu0 %v225
    %487 = vmatprep.subr.mxu0 0.0
    %488 = vmatpush1.msra.mxu0 %v226
    %489 = vmatprep.subr.mxu0 0.0
    %490 = vmatpush1.msra.mxu0 %v227
    %491 = vmatprep.subr.mxu0 0.0
    %492 = vmatpush1.msra.mxu0 0.0
    %493 = vmatprep.subr.mxu0 0.0
    %494 = vmatpush1.msra.mxu0 0.0
    %495 = vmatprep.subr.mxu0 0.0
    %496 = vmatpush1.msra.mxu0 0.0
    %497 = vmatprep.subr.mxu0 0.0
    %498 = vmatpush1.msra.mxu0 0.0
    %499 = vmatprep.subr.mxu0 0.0
    %500 = vmatpush1.msra.mxu0 0.0
    %501 = vmatprep.subr.mxu0 0.0
    %502 = vmatpush1.msra.mxu0 0.0
    %503 = vmatprep.subr.mxu0 0.0
    %504 = vmatpush1.msra.mxu0 0.0
    %505 = vmatprep.subr.mxu0 0.0
    %506 = vmatpush1.msra.mxu0 0.0
    %507 = vmatprep.subr.mxu0 0.0
    %508 = vmatpush1.msra.mxu0 0.0
    %509 = vmatprep.subr.mxu0 0.0
    %510 = vmatpush1.msra.mxu0 0.0
    %511 = vmatprep.subr.mxu0 0.0
    %512 = vmatpush1.msra.mxu0 0.0
    %513 = vmatprep.subr.mxu0 0.0
    %514 = vmatpush1.msra.mxu0 0.0
    %515 = vmatprep.subr.mxu0 0.0
    %516 = vmatpush1.msra.mxu0 0.0
    %517 = vmatprep.subr.mxu0 0.0
    %518 = vmatpush1.msra.mxu0 0.0
    %519 = vmatprep.subr.mxu0 0.0
    %520 = vmatpush1.msra.mxu0 0.0
    %521 = vmatprep.subr.mxu0 0.0
    %522 = vmatpush1.msra.mxu0 0.0
    %523 = vmatprep.subr.mxu0 0.0
    %524 = vmatpush1.msra.mxu0 0.0
    %525 = vmatprep.subr.mxu0 0.0
    %526 = vmatpush1.msra.mxu0 0.0
    %527 = vmatprep.subr.mxu0 0.0
    %528 = vmatpush1.msra.mxu0 0.0
    %529 = vmatprep.subr.mxu0 0.0
    %530 = vmatpush1.msra.mxu0 0.0
    %531 = vmatprep.subr.mxu0 0.0
    %532 = vmatpush1.msra.mxu0 0.0
    %533 = vmatprep.subr.mxu0 0.0
    %534 = vmatpush1.msra.mxu0 0.0
    %535 = vmatprep.subr.mxu0 0.0
    %536 = vmatpush1.msra.mxu0 0.0
    %537 = vmatprep.subr.mxu0 0.0
    %538 = vmatpush1.msra.mxu0 0.0
    %539 = vmatprep.subr.mxu0 0.0
    %540 = vmatpush1.msra.mxu0 0.0
    %541 = vmatprep.subr.mxu0 0.0
    %542 = vmatpush1.msra.mxu0 0.0
    %543 = vmatprep.subr.mxu0 0.0
    %544 = vmatpush1.msra.mxu0 0.0
    %545 = vmatprep.subr.mxu0 0.0
    %546 = vmatpush1.msra.mxu0 0.0
    %547 = vmatprep.mubr.f32.mxu0 0.0
    %548 = vmatmul.mubr.f32.gmra.mrb[0].mxu0 %v393
    %v549 = vpop.f32.mrb[0].mxu0
    %v550 = vadd.f32 0.0, %v549
    %v551 = vpop.f32.mrb[0].mxu0
    %552 = vdwg.mxu0
    %v554 = vrot.slane %v550, 6
    %v556 = vadd.f32 %v124, %v554
    %v558 = vrot.slane %v556, 2
    %v559 = vsel %vm232, %v558, 0
    %561 = vmatprep.subr.mxu0 0.0
    %562 = vmatpush1.msra.mxu0 %v228
    %563 = vmatprep.subr.mxu0 0.0
    %564 = vmatpush1.msra.mxu0 %v229
    %565 = vmatprep.subr.mxu0 0.0
    %566 = vmatpush1.msra.mxu0 %v230
    %567 = vmatprep.subr.mxu0 0.0
    %568 = vmatpush1.msra.mxu0 %v231
    %569 = vmatprep.subr.mxu0 0.0
    %570 = vmatpush1.msra.mxu0 0.0
    %571 = vmatprep.subr.mxu0 0.0
    %572 = vmatpush1.msra.mxu0 0.0
    %573 = vmatprep.subr.mxu0 0.0
    %574 = vmatpush1.msra.mxu0 0.0
    %575 = vmatprep.subr.mxu0 0.0
    %576 = vmatpush1.msra.mxu0 0.0
    %577 = vmatprep.subr.mxu0 0.0
    %578 = vmatpush1.msra.mxu0 0.0
    %579 = vmatprep.subr.mxu0 0.0
    %580 = vmatpush1.msra.mxu0 0.0
    %581 = vmatprep.subr.mxu0 0.0
    %582 = vmatpush1.msra.mxu0 0.0
    %583 = vmatprep.subr.mxu0 0.0
    %584 = vmatpush1.msra.mxu0 0.0
    %585 = vmatprep.subr.mxu0 0.0
    %586 = vmatpush1.msra.mxu0 0.0
    %587 = vmatprep.subr.mxu0 0.0
    %588 = vmatpush1.msra.mxu0 0.0
    %589 = vmatprep.subr.mxu0 0.0
    %590 = vmatpush1.msra.mxu0 0.0
    %591 = vmatprep.subr.mxu0 0.0
    %592 = vmatpush1.msra.mxu0 0.0
    %593 = vmatprep.subr.mxu0 0.0
    %594 = vmatpush1.msra.mxu0 0.0
    %595 = vmatprep.subr.mxu0 0.0
    %596 = vmatpush1.msra.mxu0 0.0
    %597 = vmatprep.subr.mxu0 0.0
    %598 = vmatpush1.msra.mxu0 0.0
    %599 = vmatprep.subr.mxu0 0.0
    %600 = vmatpush1.msra.mxu0 0.0
    %601 = vmatprep.subr.mxu0 0.0
    %602 = vmatpush1.msra.mxu0 0.0
    %603 = vmatprep.subr.mxu0 0.0
    %604 = vmatpush1.msra.mxu0 0.0
    %605 = vmatprep.subr.mxu0 0.0
    %606 = vmatpush1.msra.mxu0 0.0
    %607 = vmatprep.subr.mxu0 0.0
    %608 = vmatpush1.msra.mxu0 0.0
    %609 = vmatprep.subr.mxu0 0.0
    %610 = vmatpush1.msra.mxu0 0.0
    %611 = vmatprep.subr.mxu0 0.0
    %612 = vmatpush1.msra.mxu0 0.0
    %613 = vmatprep.subr.mxu0 0.0
    %614 = vmatpush1.msra.mxu0 0.0
    %615 = vmatprep.subr.mxu0 0.0
    %616 = vmatpush1.msra.mxu0 0.0
    %617 = vmatprep.subr.mxu0 0.0
    %618 = vmatpush1.msra.mxu0 0.0
    %619 = vmatprep.subr.mxu0 0.0
    %620 = vmatpush1.msra.mxu0 0.0
    %621 = vmatprep.subr.mxu0 0.0
    %622 = vmatpush1.msra.mxu0 0.0
    %623 = vmatprep.subr.mxu0 0.0
    %624 = vmatpush1.msra.mxu0 0.0
    %625 = vmatprep.mubr.f32.mxu0 0.0
    %626 = vmatmul.mubr.f32.gmra.mrb[0].mxu0 %v559
    %v627 = vpop.f32.mrb[0].mxu0
    %v628 = vadd.f32 0.0, %v627
    %v629 = vpop.f32.mrb[0].mxu0
    %630 = vdwg.mxu0
    %v632 = vrot.slane %v628, 4
    %v634 = vadd.f32 %v216, %v632
    %vm635 = vcmask 160772
    %v636 = vsel %vm635, %v634, -inf
    %637 = vmax.xlane.f32.xlu0 %v636
    %v638 = vpop.xlane.xlu0 %637
    %v639 = vsub.f32 %v634, %v638
    %v640 = vmul.f32 %v639, 1.442695
    %v641 = vpow.pop %v640
    %v642 = vsel %vm635, %v641, 0.0
    %643 = vadd.xlane.f32.xlu0 %v642
    %v644 = vpop.xlane.xlu0 %643
    %v645 = vlog2.pop %v644
    %v646 = vmul.f32 %v645, 0.6931472
    %v647 = vsub.f32 %v639, %v646
    %648 = vst.msk [vmem:[#allocation2] sm:$0x30] %vm635, %v647
    %649 = vmatprep.subr.mxu0 0.0
    %650 = vmatpush1.msra.mxu0 %v224
    %651 = vmatprep.subr.mxu0 0.0
    %652 = vmatpush1.msra.mxu0 %v225
    %653 = vmatprep.subr.mxu0 0.0
    %654 = vmatpush1.msra.mxu0 %v226
    %655 = vmatprep.subr.mxu0 0.0
    %656 = vmatpush1.msra.mxu0 %v227
    %657 = vmatprep.subr.mxu0 0.0
    %658 = vmatpush1.msra.mxu0 0.0
    %659 = vmatprep.subr.mxu0 0.0
    %660 = vmatpush1.msra.mxu0 0.0
    %661 = vmatprep.subr.mxu0 0.0
    %662 = vmatpush1.msra.mxu0 0.0
    %663 = vmatprep.subr.mxu0 0.0
    %664 = vmatpush1.msra.mxu0 0.0
    %665 = vmatprep.subr.mxu0 0.0
    %666 = vmatpush1.msra.mxu0 0.0
    %667 = vmatprep.subr.mxu0 0.0
    %668 = vmatpush1.msra.mxu0 0.0
    %669 = vmatprep.subr.mxu0 0.0
    %670 = vmatpush1.msra.mxu0 0.0
    %671 = vmatprep.subr.mxu0 0.0
    %672 = vmatpush1.msra.mxu0 0.0
    %673 = vmatprep.subr.mxu0 0.0
    %674 = vmatpush1.msra.mxu0 0.0
    %675 = vmatprep.subr.mxu0 0.0
    %676 = vmatpush1.msra.mxu0 0.0
    %677 = vmatprep.subr.mxu0 0.0
    %678 = vmatpush1.msra.mxu0 0.0
    %679 = vmatprep.subr.mxu0 0.0
    %680 = vmatpush1.msra.mxu0 0.0
    %681 = vmatprep.subr.mxu0 0.0
    %682 = vmatpush1.msra.mxu0 0.0
    %683 = vmatprep.subr.mxu0 0.0
    %684 = vmatpush1.msra.mxu0 0.0
    %685 = vmatprep.subr.mxu0 0.0
    %686 = vmatpush1.msra.mxu0 0.0
    %687 = vmatprep.subr.mxu0 0.0
    %688 = vmatpush1.msra.mxu0 0.0
    %689 = vmatprep.subr.mxu0 0.0
    %690 = vmatpush1.msra.mxu0 0.0
    %691 = vmatprep.subr.mxu0 0.0
    %692 = vmatpush1.msra.mxu0 0.0
    %693 = vmatprep.subr.mxu0 0.0
    %694 = vmatpush1.msra.mxu0 0.0
    %695 = vmatprep.subr.mxu0 0.0
    %696 = vmatpush1.msra.mxu0 0.0
    %697 = vmatprep.subr.mxu0 0.0
    %698 = vmatpush1.msra.mxu0 0.0
    %699 = vmatprep.subr.mxu0 0.0
    %700 = vmatpush1.msra.mxu0 0.0
    %701 = vmatprep.subr.mxu0 0.0
    %702 = vmatpush1.msra.mxu0 0.0
    %703 = vmatprep.subr.mxu0 0.0
    %704 = vmatpush1.msra.mxu0 0.0
    %705 = vmatprep.subr.mxu0 0.0
    %706 = vmatpush1.msra.mxu0 0.0
    %707 = vmatprep.subr.mxu0 0.0
    %708 = vmatpush1.msra.mxu0 0.0
    %709 = vmatprep.subr.mxu0 0.0
    %710 = vmatpush1.msra.mxu0 0.0
    %711 = vmatprep.subr.mxu0 0.0
    %712 = vmatpush1.msra.mxu0 0.0
    %713 = vmatprep.mubr.f32.mxu0 0.0
    %714 = vmatmul.mubr.f32.gmra.mrb[0].mxu0 %v559
    %v715 = vpop.f32.mrb[0].mxu0
    %v716 = vadd.f32 0.0, %v715
    %v717 = vpop.f32.mrb[0].mxu0
    %718 = vdwg.mxu0
    %v720 = vrot.slane %v716, 4
    %v722 = vadd.f32 %v124, %v720
    %v724 = vrot.slane %v722, 4
    %v725 = vsel %vm232, %v724, 0
    %727 = vmatprep.subr.mxu0 0.0
    %728 = vmatpush1.msra.mxu0 %v228
    %729 = vmatprep.subr.mxu0 0.0
    %730 = vmatpush1.msra.mxu0 %v229
    %731 = vmatprep.subr.mxu0 0.0
    %732 = vmatpush1.msra.mxu0 %v230
    %733 = vmatprep.subr.mxu0 0.0
    %734 = vmatpush1.msra.mxu0 %v231
    %735 = vmatprep.subr.mxu0 0.0
    %736 = vmatpush1.msra.mxu0 0.0
    %737 = vmatprep.subr.mxu0 0.0
    %738 = vmatpush1.msra.mxu0 0.0
    %739 = vmatprep.subr.mxu0 0.0
    %740 = vmatpush1.msra.mxu0 0.0
    %741 = vmatprep.subr.mxu0 0.0
    %742 = vmatpush1.msra.mxu0 0.0
    %743 = vmatprep.subr.mxu0 0.0
    %744 = vmatpush1.msra.mxu0 0.0
    %745 = vmatprep.subr.mxu0 0.0
    %746 = vmatpush1.msra.mxu0 0.0
    %747 = vmatprep.subr.mxu0 0.0
    %748 = vmatpush1.msra.mxu0 0.0
    %749 = vmatprep.subr.mxu0 0.0
    %750 = vmatpush1.msra.mxu0 0.0
    %751 = vmatprep.subr.mxu0 0.0
    %752 = vmatpush1.msra.mxu0 0.0
    %753 = vmatprep.subr.mxu0 0.0
    %754 = vmatpush1.msra.mxu0 0.0
    %755 = vmatprep.subr.mxu0 0.0
    %756 = vmatpush1.msra.mxu0 0.0
    %757 = vmatprep.subr.mxu0 0.0
    %758 = vmatpush1.msra.mxu0 0.0
    %759 = vmatprep.subr.mxu0 0.0
    %760 = vmatpush1.msra.mxu0 0.0
    %761 = vmatprep.subr.mxu0 0.0
    %762 = vmatpush1.msra.mxu0 0.0
    %763 = vmatprep.subr.mxu0 0.0
    %764 = vmatpush1.msra.mxu0 0.0
    %765 = vmatprep.subr.mxu0 0.0
    %766 = vmatpush1.msra.mxu0 0.0
    %767 = vmatprep.subr.mxu0 0.0
    %768 = vmatpush1.msra.mxu0 0.0
    %769 = vmatprep.subr.mxu0 0.0
    %770 = vmatpush1.msra.mxu0 0.0
    %771 = vmatprep.subr.mxu0 0.0
    %772 = vmatpush1.msra.mxu0 0.0
    %773 = vmatprep.subr.mxu0 0.0
    %774 = vmatpush1.msra.mxu0 0.0
    %775 = vmatprep.subr.mxu0 0.0
    %776 = vmatpush1.msra.mxu0 0.0
    %777 = vmatprep.subr.mxu0 0.0
    %778 = vmatpush1.msra.mxu0 0.0
    %779 = vmatprep.subr.mxu0 0.0
    %780 = vmatpush1.msra.mxu0 0.0
    %781 = vmatprep.subr.mxu0 0.0
    %782 = vmatpush1.msra.mxu0 0.0
    %783 = vmatprep.subr.mxu0 0.0
    %784 = vmatpush1.msra.mxu0 0.0
    %785 = vmatprep.subr.mxu0 0.0
    %786 = vmatpush1.msra.mxu0 0.0
    %787 = vmatprep.subr.mxu0 0.0
    %788 = vmatpush1.msra.mxu0 0.0
    %789 = vmatprep.subr.mxu0 0.0
    %790 = vmatpush1.msra.mxu0 0.0
    %791 = vmatprep.mubr.f32.mxu0 0.0
    %792 = vmatmul.mubr.f32.gmra.mrb[0].mxu0 %v725
    %v793 = vpop.f32.mrb[0].mxu0
    %v794 = vadd.f32 0.0, %v793
    %v795 = vpop.f32.mrb[0].mxu0
    %796 = vdwg.mxu0
    %v798 = vrot.slane %v794, 2
    %v800 = vadd.f32 %v216, %v798
    %vm801 = vcmask 162822
    %v802 = vsel %vm801, %v800, -inf
    %803 = vmax.xlane.f32.xlu0 %v802
    %v804 = vpop.xlane.xlu0 %803
    %v805 = vsub.f32 %v800, %v804
    %v806 = vmul.f32 %v805, 1.442695
    %v807 = vpow.pop %v806
    %v808 = vsel %vm801, %v807, 0.0
    %809 = vadd.xlane.f32.xlu0 %v808
    %v810 = vpop.xlane.xlu0 %809
    %v811 = vlog2.pop %v810
    %v812 = vmul.f32 %v811, 0.6931472
    %v813 = vsub.f32 %v805, %v812
    %814 = vst.msk [vmem:[#allocation2] sm:$0xc0] %vm801, %v813
    %815 = vmatprep.subr.mxu0 0.0
    %816 = vmatpush1.msra.mxu0 %v224
    %817 = vmatprep.subr.mxu0 0.0
    %818 = vmatpush1.msra.mxu0 %v225
    %819 = vmatprep.subr.mxu0 0.0
    %820 = vmatpush1.msra.mxu0 %v226
    %821 = vmatprep.subr.mxu0 0.0
    %822 = vmatpush1.msra.mxu0 %v227
    %823 = vmatprep.subr.mxu0 0.0
    %824 = vmatpush1.msra.mxu0 0.0
    %825 = vmatprep.subr.mxu0 0.0
    %826 = vmatpush1.msra.mxu0 0.0
    %827 = vmatprep.subr.mxu0 0.0
    %828 = vmatpush1.msra.mxu0 0.0
    %829 = vmatprep.subr.mxu0 0.0
    %830 = vmatpush1.msra.mxu0 0.0
    %831 = vmatprep.subr.mxu0 0.0
    %832 = vmatpush1.msra.mxu0 0.0
    %833 = vmatprep.subr.mxu0 0.0
    %834 = vmatpush1.msra.mxu0 0.0
    %835 = vmatprep.subr.mxu0 0.0
    %836 = vmatpush1.msra.mxu0 0.0
    %837 = vmatprep.subr.mxu0 0.0
    %838 = vmatpush1.msra.mxu0 0.0
    %839 = vmatprep.subr.mxu0 0.0
    %840 = vmatpush1.msra.mxu0 0.0
    %841 = vmatprep.subr.mxu0 0.0
    %842 = vmatpush1.msra.mxu0 0.0
    %843 = vmatprep.subr.mxu0 0.0
    %844 = vmatpush1.msra.mxu0 0.0
    %845 = vmatprep.subr.mxu0 0.0
    %846 = vmatpush1.msra.mxu0 0.0
    %847 = vmatprep.subr.mxu0 0.0
    %848 = vmatpush1.msra.mxu0 0.0
    %849 = vmatprep.subr.mxu0 0.0
    %850 = vmatpush1.msra.mxu0 0.0
    %851 = vmatprep.subr.mxu0 0.0
    %852 = vmatpush1.msra.mxu0 0.0
    %853 = vmatprep.subr.mxu0 0.0
    %854 = vmatpush1.msra.mxu0 0.0
    %855 = vmatprep.subr.mxu0 0.0
    %856 = vmatpush1.msra.mxu0 0.0
    %857 = vmatprep.subr.mxu0 0.0
    %858 = vmatpush1.msra.mxu0 0.0
    %859 = vmatprep.subr.mxu0 0.0
    %860 = vmatpush1.msra.mxu0 0.0
    %861 = vmatprep.subr.mxu0 0.0
    %862 = vmatpush1.msra.mxu0 0.0
    %863 = vmatprep.subr.mxu0 0.0
    %864 = vmatpush1.msra.mxu0 0.0
    %865 = vmatprep.subr.mxu0 0.0
    %866 = vmatpush1.msra.mxu0 0.0
    %867 = vmatprep.subr.mxu0 0.0
    %868 = vmatpush1.msra.mxu0 0.0
    %869 = vmatprep.subr.mxu0 0.0
    %870 = vmatpush1.msra.mxu0 0.0
    %871 = vmatprep.subr.mxu0 0.0
    %872 = vmatpush1.msra.mxu0 0.0
    %873 = vmatprep.subr.mxu0 0.0
    %874 = vmatpush1.msra.mxu0 0.0
    %875 = vmatprep.subr.mxu0 0.0
    %876 = vmatpush1.msra.mxu0 0.0
    %877 = vmatprep.subr.mxu0 0.0
    %878 = vmatpush1.msra.mxu0 0.0
    %879 = vmatprep.mubr.f32.mxu0 0.0
    %880 = vmatmul.mubr.f32.gmra.mrb[0].mxu0 %v725
    %v881 = vpop.f32.mrb[0].mxu0
    %v882 = vadd.f32 0.0, %v881
    %v883 = vpop.f32.mrb[0].mxu0
    %884 = vdwg.mxu0
    %v886 = vrot.slane %v882, 2
    %v888 = vadd.f32 %v124, %v886
    %v890 = vrot.slane %v888, 6
    %v891 = vsel %vm232, %v890, 0
    %893 = vmatprep.subr.mxu0 0.0
    %894 = vmatpush1.msra.mxu0 %v228
    %895 = vmatprep.subr.mxu0 0.0
    %896 = vmatpush1.msra.mxu0 %v229
    %897 = vmatprep.subr.mxu0 0.0
    %898 = vmatpush1.msra.mxu0 %v230
    %899 = vmatprep.subr.mxu0 0.0
    %900 = vmatpush1.msra.mxu0 %v231
    %901 = vmatprep.subr.mxu0 0.0
    %902 = vmatpush1.msra.mxu0 0.0
    %903 = vmatprep.subr.mxu0 0.0
    %904 = vmatpush1.msra.mxu0 0.0
    %905 = vmatprep.subr.mxu0 0.0
    %906 = vmatpush1.msra.mxu0 0.0
    %907 = vmatprep.subr.mxu0 0.0
    %908 = vmatpush1.msra.mxu0 0.0
    %909 = vmatprep.subr.mxu0 0.0
    %910 = vmatpush1.msra.mxu0 0.0
    %911 = vmatprep.subr.mxu0 0.0
    %912 = vmatpush1.msra.mxu0 0.0
    %913 = vmatprep.subr.mxu0 0.0
    %914 = vmatpush1.msra.mxu0 0.0
    %915 = vmatprep.subr.mxu0 0.0
    %916 = vmatpush1.msra.mxu0 0.0
    %917 = vmatprep.subr.mxu0 0.0
    %918 = vmatpush1.msra.mxu0 0.0
    %919 = vmatprep.subr.mxu0 0.0
    %920 = vmatpush1.msra.mxu0 0.0
    %921 = vmatprep.subr.mxu0 0.0
    %922 = vmatpush1.msra.mxu0 0.0
    %923 = vmatprep.subr.mxu0 0.0
    %924 = vmatpush1.msra.mxu0 0.0
    %925 = vmatprep.subr.mxu0 0.0
    %926 = vmatpush1.msra.mxu0 0.0
    %927 = vmatprep.subr.mxu0 0.0
    %928 = vmatpush1.msra.mxu0 0.0
    %929 = vmatprep.subr.mxu0 0.0
    %930 = vmatpush1.msra.mxu0 0.0
    %931 = vmatprep.subr.mxu0 0.0
    %932 = vmatpush1.msra.mxu0 0.0
    %933 = vmatprep.subr.mxu0 0.0
    %934 = vmatpush1.msra.mxu0 0.0
    %935 = vmatprep.subr.mxu0 0.0
    %936 = vmatpush1.msra.mxu0 0.0
    %937 = vmatprep.subr.mxu0 0.0
    %938 = vmatpush1.msra.mxu0 0.0
    %939 = vmatprep.subr.mxu0 0.0
    %940 = vmatpush1.msra.mxu0 0.0
    %941 = vmatprep.subr.mxu0 0.0
    %942 = vmatpush1.msra.mxu0 0.0
    %943 = vmatprep.subr.mxu0 0.0
    %944 = vmatpush1.msra.mxu0 0.0
    %945 = vmatprep.subr.mxu0 0.0
    %946 = vmatpush1.msra.mxu0 0.0
    %947 = vmatprep.subr.mxu0 0.0
    %948 = vmatpush1.msra.mxu0 0.0
    %949 = vmatprep.subr.mxu0 0.0
    %950 = vmatpush1.msra.mxu0 0.0
    %951 = vmatprep.subr.mxu0 0.0
    %952 = vmatpush1.msra.mxu0 0.0
    %953 = vmatprep.subr.mxu0 0.0
    %954 = vmatpush1.msra.mxu0 0.0
    %955 = vmatprep.subr.mxu0 0.0
    %956 = vmatpush1.msra.mxu0 0.0
    %957 = vmatprep.mubr.f32.mxu0 0.0
    %958 = vmatmul.mubr.f32.gmra.mrb[0].mxu0 %v891
    %v959 = vpop.f32.mrb[0].mxu0
    %v960 = vadd.f32 0.0, %v959
    %v961 = vpop.f32.mrb[0].mxu0
    %962 = vdwg.mxu0
    %v963 = vadd.f32 %v221, %v960
    %v964 = vsel %vm307, %v963, -inf
    %965 = vmax.xlane.f32.xlu0 %v964
    %v966 = vpop.xlane.xlu0 %965
    %v967 = vsub.f32 %v963, %v966
    %v968 = vmul.f32 %v967, 1.442695
    %v969 = vpow.pop %v968
    %v970 = vsel %vm307, %v969, 0.0
    %971 = vadd.xlane.f32.xlu0 %v970
    %v972 = vpop.xlane.xlu0 %971
    %v973 = vlog2.pop %v972
    %v974 = vmul.f32 %v973, 0.6931472
    %v975 = vsub.f32 %v967, %v974
    %976 = vst.msk [vmem:[#allocation2 + $0x8] sm:$0x3] %vm307, %v975
    %977 = vmatprep.subr.mxu0 0.0
    %978 = vmatpush1.msra.mxu0 %v224
    %979 = vmatprep.subr.mxu0 0.0
    %980 = vmatpush1.msra.mxu0 %v225
    %981 = vmatprep.subr.mxu0 0.0
    %982 = vmatpush1.msra.mxu0 %v226
    %983 = vmatprep.subr.mxu0 0.0
    %984 = vmatpush1.msra.mxu0 %v227
    %985 = vmatprep.subr.mxu0 0.0
    %986 = vmatpush1.msra.mxu0 0.0
    %987 = vmatprep.subr.mxu0 0.0
    %988 = vmatpush1.msra.mxu0 0.0
    %989 = vmatprep.subr.mxu0 0.0
    %990 = vmatpush1.msra.mxu0 0.0
    %991 = vmatprep.subr.mxu0 0.0
    %992 = vmatpush1.msra.mxu0 0.0
    %993 = vmatprep.subr.mxu0 0.0
    %994 = vmatpush1.msra.mxu0 0.0
    %995 = vmatprep.subr.mxu0 0.0
    %996 = vmatpush1.msra.mxu0 0.0
    %997 = vmatprep.subr.mxu0 0.0
    %998 = vmatpush1.msra.mxu0 0.0
    %999 = vmatprep.subr.mxu0 0.0
    %1000 = vmatpush1.msra.mxu0 0.0
    %1001 = vmatprep.subr.mxu0 0.0
    %1002 = vmatpush1.msra.mxu0 0.0
    %1003 = vmatprep.subr.mxu0 0.0
    %1004 = vmatpush1.msra.mxu0 0.0
    %1005 = vmatprep.subr.mxu0 0.0
    %1006 = vmatpush1.msra.mxu0 0.0
    %1007 = vmatprep.subr.mxu0 0.0
    %1008 = vmatpush1.msra.mxu0 0.0
    %1009 = vmatprep.subr.mxu0 0.0
    %1010 = vmatpush1.msra.mxu0 0.0
    %1011 = vmatprep.subr.mxu0 0.0
    %1012 = vmatpush1.msra.mxu0 0.0
    %1013 = vmatprep.subr.mxu0 0.0
    %1014 = vmatpush1.msra.mxu0 0.0
    %1015 = vmatprep.subr.mxu0 0.0
    %1016 = vmatpush1.msra.mxu0 0.0
    %1017 = vmatprep.subr.mxu0 0.0
    %1018 = vmatpush1.msra.mxu0 0.0
    %1019 = vmatprep.subr.mxu0 0.0
    %1020 = vmatpush1.msra.mxu0 0.0
    %1021 = vmatprep.subr.mxu0 0.0
    %1022 = vmatpush1.msra.mxu0 0.0
    %1023 = vmatprep.subr.mxu0 0.0
    %1024 = vmatpush1.msra.mxu0 0.0
    %1025 = vmatprep.subr.mxu0 0.0
    %1026 = vmatpush1.msra.mxu0 0.0
    %1027 = vmatprep.subr.mxu0 0.0
    %1028 = vmatpush1.msra.mxu0 0.0
    %1029 = vmatprep.subr.mxu0 0.0
    %1030 = vmatpush1.msra.mxu0 0.0
    %1031 = vmatprep.subr.mxu0 0.0
    %1032 = vmatpush1.msra.mxu0 0.0
    %1033 = vmatprep.subr.mxu0 0.0
    %1034 = vmatpush1.msra.mxu0 0.0
    %1035 = vmatprep.subr.mxu0 0.0
    %1036 = vmatpush1.msra.mxu0 0.0
    %1037 = vmatprep.subr.mxu0 0.0
    %1038 = vmatpush1.msra.mxu0 0.0
    %1039 = vmatprep.subr.mxu0 0.0
    %1040 = vmatpush1.msra.mxu0 0.0
    %1041 = vmatprep.mubr.f32.mxu0 0.0
    %1042 = vmatmul.mubr.f32.gmra.mrb[0].mxu0 %v891
    %v1043 = vpop.f32.mrb[0].mxu0
    %v1044 = vadd.f32 0.0, %v1043
    %v1045 = vpop.f32.mrb[0].mxu0
    %1046 = vdwg.mxu0
    %v1047 = vadd.f32 %v129, %v1044
    %v1049 = vsel %vm232, %v1047, 0
    %1051 = vmatprep.subr.mxu0 0.0
    %1052 = vmatpush1.msra.mxu0 %v228
    %1053 = vmatprep.subr.mxu0 0.0
    %1054 = vmatpush1.msra.mxu0 %v229
    %1055 = vmatprep.subr.mxu0 0.0
    %1056 = vmatpush1.msra.mxu0 %v230
    %1057 = vmatprep.subr.mxu0 0.0
    %1058 = vmatpush1.msra.mxu0 %v231
    %1059 = vmatprep.subr.mxu0 0.0
    %1060 = vmatpush1.msra.mxu0 0.0
    %1061 = vmatprep.subr.mxu0 0.0
    %1062 = vmatpush1.msra.mxu0 0.0
    %1063 = vmatprep.subr.mxu0 0.0
    %1064 = vmatpush1.msra.mxu0 0.0
    %1065 = vmatprep.subr.mxu0 0.0
    %1066 = vmatpush1.msra.mxu0 0.0
    %1067 = vmatprep.subr.mxu0 0.0
    %1068 = vmatpush1.msra.mxu0 0.0
    %1069 = vmatprep.subr.mxu0 0.0
    %1070 = vmatpush1.msra.mxu0 0.0
    %1071 = vmatprep.subr.mxu0 0.0
    %1072 = vmatpush1.msra.mxu0 0.0
    %1073 = vmatprep.subr.mxu0 0.0
    %1074 = vmatpush1.msra.mxu0 0.0
    %1075 = vmatprep.subr.mxu0 0.0
    %1076 = vmatpush1.msra.mxu0 0.0
    %1077 = vmatprep.subr.mxu0 0.0
    %1078 = vmatpush1.msra.mxu0 0.0
    %1079 = vmatprep.subr.mxu0 0.0
    %1080 = vmatpush1.msra.mxu0 0.0
    %1081 = vmatprep.subr.mxu0 0.0
    %1082 = vmatpush1.msra.mxu0 0.0
    %1083 = vmatprep.subr.mxu0 0.0
    %1084 = vmatpush1.msra.mxu0 0.0
    %1085 = vmatprep.subr.mxu0 0.0
    %1086 = vmatpush1.msra.mxu0 0.0
    %1087 = vmatprep.subr.mxu0 0.0
    %1088 = vmatpush1.msra.mxu0 0.0
    %1089 = vmatprep.subr.mxu0 0.0
    %1090 = vmatpush1.msra.mxu0 0.0
    %1091 = vmatprep.subr.mxu0 0.0
    %1092 = vmatpush1.msra.mxu0 0.0
    %1093 = vmatprep.subr.mxu0 0.0
    %1094 = vmatpush1.msra.mxu0 0.0
    %1095 = vmatprep.subr.mxu0 0.0
    %1096 = vmatpush1.msra.mxu0 0.0
    %1097 = vmatprep.subr.mxu0 0.0
    %1098 = vmatpush1.msra.mxu0 0.0
    %1099 = vmatprep.subr.mxu0 0.0
    %1100 = vmatpush1.msra.mxu0 0.0
    %1101 = vmatprep.subr.mxu0 0.0
    %1102 = vmatpush1.msra.mxu0 0.0
    %1103 = vmatprep.subr.mxu0 0.0
    %1104 = vmatpush1.msra.mxu0 0.0
    %1105 = vmatprep.subr.mxu0 0.0
    %1106 = vmatpush1.msra.mxu0 0.0
    %1107 = vmatprep.subr.mxu0 0.0
    %1108 = vmatpush1.msra.mxu0 0.0
    %1109 = vmatprep.subr.mxu0 0.0
    %1110 = vmatpush1.msra.mxu0 0.0
    %1111 = vmatprep.subr.mxu0 0.0
    %1112 = vmatpush1.msra.mxu0 0.0
    %1113 = vmatprep.subr.mxu0 0.0
    %1114 = vmatpush1.msra.mxu0 0.0
    %1115 = vmatprep.mubr.f32.mxu0 0.0
    %1116 = vmatmul.mubr.f32.gmra.mrb[0].mxu0 %v1049
    %v1117 = vpop.f32.mrb[0].mxu0
    %v1118 = vadd.f32 0.0, %v1117
    %v1119 = vpop.f32.mrb[0].mxu0
    %1120 = vdwg.mxu0
    %v1122 = vrot.slane %v1118, 6
    %v1124 = vadd.f32 %v221, %v1122
    %v1125 = vsel %vm469, %v1124, -inf
    %1126 = vmax.xlane.f32.xlu0 %v1125
    %v1127 = vpop.xlane.xlu0 %1126
    %v1128 = vsub.f32 %v1124, %v1127
    %v1129 = vmul.f32 %v1128, 1.442695
    %v1130 = vpow.pop %v1129
    %v1131 = vsel %vm469, %v1130, 0.0
    %1132 = vadd.xlane.f32.xlu0 %v1131
    %v1133 = vpop.xlane.xlu0 %1132
    %v1134 = vlog2.pop %v1133
    %v1135 = vmul.f32 %v1134, 0.6931472
    %v1136 = vsub.f32 %v1128, %v1135
    %1137 = vst.msk [vmem:[#allocation2 + $0x8] sm:$0xc] %vm469, %v1136
    %1138 = vmatprep.subr.mxu0 0.0
    %1139 = vmatpush1.msra.mxu0 %v224
    %1140 = vmatprep.subr.mxu0 0.0
    %1141 = vmatpush1.msra.mxu0 %v225
    %1142 = vmatprep.subr.mxu0 0.0
    %1143 = vmatpush1.msra.mxu0 %v226
    %1144 = vmatprep.subr.mxu0 0.0
    %1145 = vmatpush1.msra.mxu0 %v227
    %1146 = vmatprep.subr.mxu0 0.0
    %1147 = vmatpush1.msra.mxu0 0.0
    %1148 = vmatprep.subr.mxu0 0.0
    %1149 = vmatpush1.msra.mxu0 0.0
    %1150 = vmatprep.subr.mxu0 0.0
    %1151 = vmatpush1.msra.mxu0 0.0
    %1152 = vmatprep.subr.mxu0 0.0
    %1153 = vmatpush1.msra.mxu0 0.0
    %1154 = vmatprep.subr.mxu0 0.0
    %1155 = vmatpush1.msra.mxu0 0.0
    %1156 = vmatprep.subr.mxu0 0.0
    %1157 = vmatpush1.msra.mxu0 0.0
    %1158 = vmatprep.subr.mxu0 0.0
    %1159 = vmatpush1.msra.mxu0 0.0
    %1160 = vmatprep.subr.mxu0 0.0
    %1161 = vmatpush1.msra.mxu0 0.0
    %1162 = vmatprep.subr.mxu0 0.0
    %1163 = vmatpush1.msra.mxu0 0.0
    %1164 = vmatprep.subr.mxu0 0.0
    %1165 = vmatpush1.msra.mxu0 0.0
    %1166 = vmatprep.subr.mxu0 0.0
    %1167 = vmatpush1.msra.mxu0 0.0
    %1168 = vmatprep.subr.mxu0 0.0
    %1169 = vmatpush1.msra.mxu0 0.0
    %1170 = vmatprep.subr.mxu0 0.0
    %1171 = vmatpush1.msra.mxu0 0.0
    %1172 = vmatprep.subr.mxu0 0.0
    %1173 = vmatpush1.msra.mxu0 0.0
    %1174 = vmatprep.subr.mxu0 0.0
    %1175 = vmatpush1.msra.mxu0 0.0
    %1176 = vmatprep.subr.mxu0 0.0
    %1177 = vmatpush1.msra.mxu0 0.0
    %1178 = vmatprep.subr.mxu0 0.0
    %1179 = vmatpush1.msra.mxu0 0.0
    %1180 = vmatprep.subr.mxu0 0.0
    %1181 = vmatpush1.msra.mxu0 0.0
    %1182 = vmatprep.subr.mxu0 0.0
    %1183 = vmatpush1.msra.mxu0 0.0
    %1184 = vmatprep.subr.mxu0 0.0
    %1185 = vmatpush1.msra.mxu0 0.0
    %1186 = vmatprep.subr.mxu0 0.0
    %1187 = vmatpush1.msra.mxu0 0.0
    %1188 = vmatprep.subr.mxu0 0.0
    %1189 = vmatpush1.msra.mxu0 0.0
    %1190 = vmatprep.subr.mxu0 0.0
    %1191 = vmatpush1.msra.mxu0 0.0
    %1192 = vmatprep.subr.mxu0 0.0
    %1193 = vmatpush1.msra.mxu0 0.0
    %1194 = vmatprep.subr.mxu0 0.0
    %1195 = vmatpush1.msra.mxu0 0.0
    %1196 = vmatprep.subr.mxu0 0.0
    %1197 = vmatpush1.msra.mxu0 0.0
    %1198 = vmatprep.subr.mxu0 0.0
    %1199 = vmatpush1.msra.mxu0 0.0
    %1200 = vmatprep.subr.mxu0 0.0
    %1201 = vmatpush1.msra.mxu0 0.0
    %1202 = vmatprep.mubr.f32.mxu0 0.0
    %1203 = vmatmul.mubr.f32.gmra.mrb[0].mxu0 %v1049
    %v1204 = vpop.f32.mrb[0].mxu0
    %v1205 = vadd.f32 0.0, %v1204
    %v1206 = vpop.f32.mrb[0].mxu0
    %1207 = vdwg.mxu0
    %v1209 = vrot.slane %v1205, 6
    %v1211 = vadd.f32 %v129, %v1209
    %v1213 = vrot.slane %v1211, 2
    %v1214 = vsel %vm232, %v1213, 0
    %1216 = vmatprep.subr.mxu0 0.0
    %1217 = vmatpush1.msra.mxu0 %v228
    %1218 = vmatprep.subr.mxu0 0.0
    %1219 = vmatpush1.msra.mxu0 %v229
    %1220 = vmatprep.subr.mxu0 0.0
    %1221 = vmatpush1.msra.mxu0 %v230
    %1222 = vmatprep.subr.mxu0 0.0
    %1223 = vmatpush1.msra.mxu0 %v231
    %1224 = vmatprep.subr.mxu0 0.0
    %1225 = vmatpush1.msra.mxu0 0.0
    %1226 = vmatprep.subr.mxu0 0.0
    %1227 = vmatpush1.msra.mxu0 0.0
    %1228 = vmatprep.subr.mxu0 0.0
    %1229 = vmatpush1.msra.mxu0 0.0
    %1230 = vmatprep.subr.mxu0 0.0
    %1231 = vmatpush1.msra.mxu0 0.0
    %1232 = vmatprep.subr.mxu0 0.0
    %1233 = vmatpush1.msra.mxu0 0.0
    %1234 = vmatprep.subr.mxu0 0.0
    %1235 = vmatpush1.msra.mxu0 0.0
    %1236 = vmatprep.subr.mxu0 0.0
    %1237 = vmatpush1.msra.mxu0 0.0
    %1238 = vmatprep.subr.mxu0 0.0
    %1239 = vmatpush1.msra.mxu0 0.0
    %1240 = vmatprep.subr.mxu0 0.0
    %1241 = vmatpush1.msra.mxu0 0.0
    %1242 = vmatprep.subr.mxu0 0.0
    %1243 = vmatpush1.msra.mxu0 0.0
    %1244 = vmatprep.subr.mxu0 0.0
    %1245 = vmatpush1.msra.mxu0 0.0
    %1246 = vmatprep.subr.mxu0 0.0
    %1247 = vmatpush1.msra.mxu0 0.0
    %1248 = vmatprep.subr.mxu0 0.0
    %1249 = vmatpush1.msra.mxu0 0.0
    %1250 = vmatprep.subr.mxu0 0.0
    %1251 = vmatpush1.msra.mxu0 0.0
    %1252 = vmatprep.subr.mxu0 0.0
    %1253 = vmatpush1.msra.mxu0 0.0
    %1254 = vmatprep.subr.mxu0 0.0
    %1255 = vmatpush1.msra.mxu0 0.0
    %1256 = vmatprep.subr.mxu0 0.0
    %1257 = vmatpush1.msra.mxu0 0.0
    %1258 = vmatprep.subr.mxu0 0.0
    %1259 = vmatpush1.msra.mxu0 0.0
    %1260 = vmatprep.subr.mxu0 0.0
    %1261 = vmatpush1.msra.mxu0 0.0
    %1262 = vmatprep.subr.mxu0 0.0
    %1263 = vmatpush1.msra.mxu0 0.0
    %1264 = vmatprep.subr.mxu0 0.0
    %1265 = vmatpush1.msra.mxu0 0.0
    %1266 = vmatprep.subr.mxu0 0.0
    %1267 = vmatpush1.msra.mxu0 0.0
    %1268 = vmatprep.subr.mxu0 0.0
    %1269 = vmatpush1.msra.mxu0 0.0
    %1270 = vmatprep.subr.mxu0 0.0
    %1271 = vmatpush1.msra.mxu0 0.0
    %1272 = vmatprep.subr.mxu0 0.0
    %1273 = vmatpush1.msra.mxu0 0.0
    %1274 = vmatprep.subr.mxu0 0.0
    %1275 = vmatpush1.msra.mxu0 0.0
    %1276 = vmatprep.subr.mxu0 0.0
    %1277 = vmatpush1.msra.mxu0 0.0
    %1278 = vmatprep.subr.mxu0 0.0
    %1279 = vmatpush1.msra.mxu0 0.0
    %1280 = vmatprep.mubr.f32.mxu0 0.0
    %1281 = vmatmul.mubr.f32.gmra.mrb[0].mxu0 %v1214
    %v1282 = vpop.f32.mrb[0].mxu0
    %v1283 = vadd.f32 0.0, %v1282
    %v1284 = vpop.f32.mrb[0].mxu0
    %1285 = vdwg.mxu0
    %v1287 = vrot.slane %v1283, 4
    %v1289 = vadd.f32 %v221, %v1287
    %v1290 = vsel %vm635, %v1289, -inf
    %1291 = vmax.xlane.f32.xlu0 %v1290
    %v1292 = vpop.xlane.xlu0 %1291
    %v1293 = vsub.f32 %v1289, %v1292
    %v1294 = vmul.f32 %v1293, 1.442695
    %v1295 = vpow.pop %v1294
    %v1296 = vsel %vm635, %v1295, 0.0
    %1297 = vadd.xlane.f32.xlu0 %v1296
    %v1298 = vpop.xlane.xlu0 %1297
    %v1299 = vlog2.pop %v1298
    %v1300 = vmul.f32 %v1299, 0.6931472
    %v1301 = vsub.f32 %v1293, %v1300
    %1302 = vst.msk [vmem:[#allocation2 + $0x8] sm:$0x30] %vm635, %v1301
    %1303 = vmatprep.subr.mxu0 0.0
    %1304 = vmatpush1.msra.mxu0 %v224
    %1305 = vmatprep.subr.mxu0 0.0
    %1306 = vmatpush1.msra.mxu0 %v225
    %1307 = vmatprep.subr.mxu0 0.0
    %1308 = vmatpush1.msra.mxu0 %v226
    %1309 = vmatprep.subr.mxu0 0.0
    %1310 = vmatpush1.msra.mxu0 %v227
    %1311 = vmatprep.subr.mxu0 0.0
    %1312 = vmatpush1.msra.mxu0 0.0
    %1313 = vmatprep.subr.mxu0 0.0
    %1314 = vmatpush1.msra.mxu0 0.0
    %1315 = vmatprep.subr.mxu0 0.0
    %1316 = vmatpush1.msra.mxu0 0.0
    %1317 = vmatprep.subr.mxu0 0.0
    %1318 = vmatpush1.msra.mxu0 0.0
    %1319 = vmatprep.subr.mxu0 0.0
    %1320 = vmatpush1.msra.mxu0 0.0
    %1321 = vmatprep.subr.mxu0 0.0
    %1322 = vmatpush1.msra.mxu0 0.0
    %1323 = vmatprep.subr.mxu0 0.0
    %1324 = vmatpush1.msra.mxu0 0.0
    %1325 = vmatprep.subr.mxu0 0.0
    %1326 = vmatpush1.msra.mxu0 0.0
    %1327 = vmatprep.subr.mxu0 0.0
    %1328 = vmatpush1.msra.mxu0 0.0
    %1329 = vmatprep.subr.mxu0 0.0
    %1330 = vmatpush1.msra.mxu0 0.0
    %1331 = vmatprep.subr.mxu0 0.0
    %1332 = vmatpush1.msra.mxu0 0.0
    %1333 = vmatprep.subr.mxu0 0.0
    %1334 = vmatpush1.msra.mxu0 0.0
    %1335 = vmatprep.subr.mxu0 0.0
    %1336 = vmatpush1.msra.mxu0 0.0
    %1337 = vmatprep.subr.mxu0 0.0
    %1338 = vmatpush1.msra.mxu0 0.0
    %1339 = vmatprep.subr.mxu0 0.0
    %1340 = vmatpush1.msra.mxu0 0.0
    %1341 = vmatprep.subr.mxu0 0.0
    %1342 = vmatpush1.msra.mxu0 0.0
    %1343 = vmatprep.subr.mxu0 0.0
    %1344 = vmatpush1.msra.mxu0 0.0
    %1345 = vmatprep.subr.mxu0 0.0
    %1346 = vmatpush1.msra.mxu0 0.0
    %1347 = vmatprep.subr.mxu0 0.0
    %1348 = vmatpush1.msra.mxu0 0.0
    %1349 = vmatprep.subr.mxu0 0.0
    %1350 = vmatpush1.msra.mxu0 0.0
    %1351 = vmatprep.subr.mxu0 0.0
    %1352 = vmatpush1.msra.mxu0 0.0
    %1353 = vmatprep.subr.mxu0 0.0
    %1354 = vmatpush1.msra.mxu0 0.0
    %1355 = vmatprep.subr.mxu0 0.0
    %1356 = vmatpush1.msra.mxu0 0.0
    %1357 = vmatprep.subr.mxu0 0.0
    %1358 = vmatpush1.msra.mxu0 0.0
    %1359 = vmatprep.subr.mxu0 0.0
    %1360 = vmatpush1.msra.mxu0 0.0
    %1361 = vmatprep.subr.mxu0 0.0
    %1362 = vmatpush1.msra.mxu0 0.0
    %1363 = vmatprep.subr.mxu0 0.0
    %1364 = vmatpush1.msra.mxu0 0.0
    %1365 = vmatprep.subr.mxu0 0.0
    %1366 = vmatpush1.msra.mxu0 0.0
    %1367 = vmatprep.mubr.f32.mxu0 0.0
    %1368 = vmatmul.mubr.f32.gmra.mrb[0].mxu0 %v1214
    %v1369 = vpop.f32.mrb[0].mxu0
    %v1370 = vadd.f32 0.0, %v1369
    %v1371 = vpop.f32.mrb[0].mxu0
    %1372 = vdwg.mxu0
    %v1374 = vrot.slane %v1370, 4
    %v1376 = vadd.f32 %v129, %v1374
    %v1378 = vrot.slane %v1376, 4
    %v1379 = vsel %vm232, %v1378, 0
    %1381 = vmatprep.subr.mxu0 0.0
    %1382 = vmatpush1.msra.mxu0 %v228
    %1383 = vmatprep.subr.mxu0 0.0
    %1384 = vmatpush1.msra.mxu0 %v229
    %1385 = vmatprep.subr.mxu0 0.0
    %1386 = vmatpush1.msra.mxu0 %v230
    %1387 = vmatprep.subr.mxu0 0.0
    %1388 = vmatpush1.msra.mxu0 %v231
    %1389 = vmatprep.subr.mxu0 0.0
    %1390 = vmatpush1.msra.mxu0 0.0
    %1391 = vmatprep.subr.mxu0 0.0
    %1392 = vmatpush1.msra.mxu0 0.0
    %1393 = vmatprep.subr.mxu0 0.0
    %1394 = vmatpush1.msra.mxu0 0.0
    %1395 = vmatprep.subr.mxu0 0.0
    %1396 = vmatpush1.msra.mxu0 0.0
    %1397 = vmatprep.subr.mxu0 0.0
    %1398 = vmatpush1.msra.mxu0 0.0
    %1399 = vmatprep.subr.mxu0 0.0
    %1400 = vmatpush1.msra.mxu0 0.0
    %1401 = vmatprep.subr.mxu0 0.0
    %1402 = vmatpush1.msra.mxu0 0.0
    %1403 = vmatprep.subr.mxu0 0.0
    %1404 = vmatpush1.msra.mxu0 0.0
    %1405 = vmatprep.subr.mxu0 0.0
    %1406 = vmatpush1.msra.mxu0 0.0
    %1407 = vmatprep.subr.mxu0 0.0
    %1408 = vmatpush1.msra.mxu0 0.0
    %1409 = vmatprep.subr.mxu0 0.0
    %1410 = vmatpush1.msra.mxu0 0.0
    %1411 = vmatprep.subr.mxu0 0.0
    %1412 = vmatpush1.msra.mxu0 0.0
    %1413 = vmatprep.subr.mxu0 0.0
    %1414 = vmatpush1.msra.mxu0 0.0
    %1415 = vmatprep.subr.mxu0 0.0
    %1416 = vmatpush1.msra.mxu0 0.0
    %1417 = vmatprep.subr.mxu0 0.0
    %1418 = vmatpush1.msra.mxu0 0.0
    %1419 = vmatprep.subr.mxu0 0.0
    %1420 = vmatpush1.msra.mxu0 0.0
    %1421 = vmatprep.subr.mxu0 0.0
    %1422 = vmatpush1.msra.mxu0 0.0
    %1423 = vmatprep.subr.mxu0 0.0
    %1424 = vmatpush1.msra.mxu0 0.0
    %1425 = vmatprep.subr.mxu0 0.0
    %1426 = vmatpush1.msra.mxu0 0.0
    %1427 = vmatprep.subr.mxu0 0.0
    %1428 = vmatpush1.msra.mxu0 0.0
    %1429 = vmatprep.subr.mxu0 0.0
    %1430 = vmatpush1.msra.mxu0 0.0
    %1431 = vmatprep.subr.mxu0 0.0
    %1432 = vmatpush1.msra.mxu0 0.0
    %1433 = vmatprep.subr.mxu0 0.0
    %1434 = vmatpush1.msra.mxu0 0.0
    %1435 = vmatprep.subr.mxu0 0.0
    %1436 = vmatpush1.msra.mxu0 0.0
    %1437 = vmatprep.subr.mxu0 0.0
    %1438 = vmatpush1.msra.mxu0 0.0
    %1439 = vmatprep.subr.mxu0 0.0
    %1440 = vmatpush1.msra.mxu0 0.0
    %1441 = vmatprep.subr.mxu0 0.0
    %1442 = vmatpush1.msra.mxu0 0.0
    %1443 = vmatprep.subr.mxu0 0.0
    %1444 = vmatpush1.msra.mxu0 0.0
    %1445 = vmatprep.mubr.f32.mxu0 0.0
    %1446 = vmatmul.mubr.f32.gmra.mrb[0].mxu0 %v1379
    %v1447 = vpop.f32.mrb[0].mxu0
    %v1448 = vadd.f32 0.0, %v1447
    %v1449 = vpop.f32.mrb[0].mxu0
    %1450 = vdwg.mxu0
    %v1452 = vrot.slane %v1448, 2
    %v1454 = vadd.f32 %v221, %v1452
    %v1455 = vsel %vm801, %v1454, -inf
    %1456 = vmax.xlane.f32.xlu0 %v1455
    %v1457 = vpop.xlane.xlu0 %1456
    %v1458 = vsub.f32 %v1454, %v1457
    %v1459 = vmul.f32 %v1458, 1.442695
    %v1460 = vpow.pop %v1459
    %v1461 = vsel %vm801, %v1460, 0.0
    %1462 = vadd.xlane.f32.xlu0 %v1461
    %v1463 = vpop.xlane.xlu0 %1462
    %v1464 = vlog2.pop %v1463
    %v1465 = vmul.f32 %v1464, 0.6931472
    %v1466 = vsub.f32 %v1458, %v1465
    %1467 = vst.msk [vmem:[#allocation2 + $0x8] sm:$0xc0] %vm801, %v1466
    %1468 = vmatprep.subr.mxu0 0.0
    %1469 = vmatpush1.msra.mxu0 %v224
    %1470 = vmatprep.subr.mxu0 0.0
    %1471 = vmatpush1.msra.mxu0 %v225
    %1472 = vmatprep.subr.mxu0 0.0
    %1473 = vmatpush1.msra.mxu0 %v226
    %1474 = vmatprep.subr.mxu0 0.0
    %1475 = vmatpush1.msra.mxu0 %v227
    %1476 = vmatprep.subr.mxu0 0.0
    %1477 = vmatpush1.msra.mxu0 0.0
    %1478 = vmatprep.subr.mxu0 0.0
    %1479 = vmatpush1.msra.mxu0 0.0
    %1480 = vmatprep.subr.mxu0 0.0
    %1481 = vmatpush1.msra.mxu0 0.0
    %1482 = vmatprep.subr.mxu0 0.0
    %1483 = vmatpush1.msra.mxu0 0.0
    %1484 = vmatprep.subr.mxu0 0.0
    %1485 = vmatpush1.msra.mxu0 0.0
    %1486 = vmatprep.subr.mxu0 0.0
    %1487 = vmatpush1.msra.mxu0 0.0
    %1488 = vmatprep.subr.mxu0 0.0
    %1489 = vmatpush1.msra.mxu0 0.0
    %1490 = vmatprep.subr.mxu0 0.0
    %1491 = vmatpush1.msra.mxu0 0.0
    %1492 = vmatprep.subr.mxu0 0.0
    %1493 = vmatpush1.msra.mxu0 0.0
    %1494 = vmatprep.subr.mxu0 0.0
    %1495 = vmatpush1.msra.mxu0 0.0
    %1496 = vmatprep.subr.mxu0 0.0
    %1497 = vmatpush1.msra.mxu0 0.0
    %1498 = vmatprep.subr.mxu0 0.0
    %1499 = vmatpush1.msra.mxu0 0.0
    %1500 = vmatprep.subr.mxu0 0.0
    %1501 = vmatpush1.msra.mxu0 0.0
    %1502 = vmatprep.subr.mxu0 0.0
    %1503 = vmatpush1.msra.mxu0 0.0
    %1504 = vmatprep.subr.mxu0 0.0
    %1505 = vmatpush1.msra.mxu0 0.0
    %1506 = vmatprep.subr.mxu0 0.0
    %1507 = vmatpush1.msra.mxu0 0.0
    %1508 = vmatprep.subr.mxu0 0.0
    %1509 = vmatpush1.msra.mxu0 0.0
    %1510 = vmatprep.subr.mxu0 0.0
    %1511 = vmatpush1.msra.mxu0 0.0
    %1512 = vmatprep.subr.mxu0 0.0
    %1513 = vmatpush1.msra.mxu0 0.0
    %1514 = vmatprep.subr.mxu0 0.0
    %1515 = vmatpush1.msra.mxu0 0.0
    %1516 = vmatprep.subr.mxu0 0.0
    %1517 = vmatpush1.msra.mxu0 0.0
    %1518 = vmatprep.subr.mxu0 0.0
    %1519 = vmatpush1.msra.mxu0 0.0
    %1520 = vmatprep.subr.mxu0 0.0
    %1521 = vmatpush1.msra.mxu0 0.0
    %1522 = vmatprep.subr.mxu0 0.0
    %1523 = vmatpush1.msra.mxu0 0.0
    %1524 = vmatprep.subr.mxu0 0.0
    %1525 = vmatpush1.msra.mxu0 0.0
    %1526 = vmatprep.subr.mxu0 0.0
    %1527 = vmatpush1.msra.mxu0 0.0
    %1528 = vmatprep.subr.mxu0 0.0
    %1529 = vmatpush1.msra.mxu0 0.0
    %1530 = vmatprep.subr.mxu0 0.0
    %1531 = vmatpush1.msra.mxu0 0.0
    %1532 = vmatprep.mubr.f32.mxu0 0.0
    %1533 = vmatmul.mubr.f32.gmra.mrb[0].mxu0 %v1379
    %v1534 = vpop.f32.mrb[0].mxu0
    %v1535 = vadd.f32 0.0, %v1534
    %v1536 = vpop.f32.mrb[0].mxu0
    %1537 = vdwg.mxu0
    %v1539 = vrot.slane %v1535, 2
    %v1541 = vadd.f32 %v129, %v1539
    %vm1542 = vcmask 261126
    %1543 = vst.msk [vmem:[#allocation4 - $0x6] sm:$0xc0] %vm1542, %v1541
    // Predicated region
    $region30: #{tpu_custom_call.1} parent=1 // pred_check
      _
    $region31: #{tpu_custom_call.1} parent=1 // pred_check_branch
      %1545 = sbr.rel (0) target = $region33
    $region32: #{tpu_custom_call.1} parent=1 // pred_region
      %s1547 = ssub.s32 256, 256
      %1548 = vsyncadd [#allocation3], %s1547
      %s1549 = sshll.u32 [#allocation2], 4
      %s1550 = int_to_ptr.vmem [resolvable:$true] %s1549
      %1555 = dma.vmem_to_hbm [thread:$0]  %s1550, 256, %s7, [#allocation3], 128, 128, 8
    $region33: #{tpu_custom_call.1} parent=1 // pred_fallthru
      _
    // Predicated region
    $region34: #{tpu_custom_call.1} parent=1 // pred_check
      _
    $region35: #{tpu_custom_call.1} parent=1 // pred_check_branch
      %1557 = sbr.rel (0) target = $region37
    $region36: #{tpu_custom_call.1} parent=1 // pred_region
      %s1559 = ssub.s32 32, 32
      %1560 = vsyncadd [#allocation5], %s1559
      %s1562 = sshll.u32 [#allocation4], 4
      %s1563 = int_to_ptr.vmem [resolvable:$true] %s1562
      %1565 = dma.vmem_to_hbm [thread:$0]  %s1563, 32, %s8, [#allocation5]
    $region37: #{tpu_custom_call.1} parent=1 // pred_fallthru
      _
    // Predicated region
    $region38: #{tpu_custom_call.1} parent=1 // pred_check
      _
    $region39: #{tpu_custom_call.1} parent=1 // pred_check_branch
      %1567 = sbr.rel (0) target = $region41
    $region40: #{tpu_custom_call.1} parent=1 // pred_region
      %1568 = dma.done [#allocation3], 256
    $region41: #{tpu_custom_call.1} parent=1 // pred_fallthru
      _
    // Predicated region
    $region42: #{tpu_custom_call.1} parent=1 // pred_check
      _
    $region43: #{tpu_custom_call.1} parent=1 // pred_check_branch
      %1570 = sbr.rel (0) target = $region45
    $region44: #{tpu_custom_call.1} parent=1 // pred_region
      %1571 = dma.done [#allocation5], 32
    $region45: #{tpu_custom_call.1} parent=1 // pred_fallthru
      _
    %1572 = vsyncpa [#allocation3], 1
    %1573 = vsyncpa [#allocation5], 1

</llo_original>
